<compile_context>
chip_gen: v5e
topology: v5e:2x2
jax: 0.10.0
libtpu: 0.0.40
codegen_flags: <defaults>
</compile_context>

<pallas_src>
import functools

import jax
import jax.numpy as jnp
from jax import lax
from jax.experimental import pallas as pl
from jax.experimental.pallas import tpu as pltpu

EPS = 1e-5  # nn.BatchNorm2d default eps


def _band_weights(wt, W):
    """Fold kw taps + zero padding of a 3x3 'same' conv into banded bf16 weights.

    wt: (3, 3, Cin, Cout) HWIO.  Returns (3*W*Cin, W*Cout) bf16, kh-major:
    block kh has B[w_in*Cin + ci, w_out*Cout + co] = wt[kh, w_in - w_out + 1,
    ci, co] when |w_in - w_out| <= 1, else 0 (missing taps == zero padding).
    """
    Cin, Cout = wt.shape[2], wt.shape[3]
    eyes = jnp.stack(
        [jnp.eye(W, W, k=-(kw - 1), dtype=wt.dtype) for kw in range(3)])  # (3,W,W)
    band = jnp.einsum("kio,hkcd->hicod", eyes, wt)       # (3, W, Cin, W, Cout)
    return band.reshape(3 * W * Cin, W * Cout).astype(jnp.bfloat16)


def _conv_stats_kernel(x_ref, w_ref, scale_ref, shift_ref,
                       y_ref, sum_ref, sq_ref, *, H, apply_bn_relu):
    """One row tile: (optional bn-apply + relu) -> 3x3 conv -> partial BN stats.

    x_ref     : (TR, W*C)    f32 activation tile (TR = tile_images * H rows)
    w_ref     : (3*W*C, W*C) bf16 banded conv weight (kh-major), resident
    scale_ref : (1, W*C)     f32 folded BN scale (unused if apply_bn_relu=False)
    shift_ref : (1, W*C)     f32 folded BN shift
    y_ref     : (TR, W*C)    f32 conv output tile
    sum_ref   : (1, 1, W*C)  f32 per-column sum of y over this tile's rows
    sq_ref    : (1, 1, W*C)  f32 per-column sum of y*y
    """
    x = x_ref[...]
    if apply_bn_relu:
        x = jnp.maximum(x * scale_ref[...] + shift_ref[...], 0.0)
    rows = x.shape[0]
    h_idx = lax.broadcasted_iota(jnp.int32, (rows, 1), 0) % H
    # kh taps: sublane roll (XLU) + mask of the "same" zero padding at h==0 /
    # h==H-1, concatenated along lanes so the conv is ONE bf16 matmul, K=3*W*C.
    x_dn = jnp.where(h_idx == 0, 0.0, pltpu.roll(x, shift=1, axis=0))
    x_up = jnp.where(h_idx == H - 1, 0.0, pltpu.roll(x, shift=rows - 1, axis=0))
    taps = jnp.concatenate([x_dn, x, x_up], axis=1).astype(jnp.bfloat16)
    y = jnp.dot(taps, w_ref[...], preferred_element_type=jnp.float32)
    y_ref[...] = y
    # Per-tile partial BN statistics, kept strictly f32.
    sum_ref[0] = jnp.sum(y, axis=0, keepdims=True)
    sq_ref[0] = jnp.sum(y * y, axis=0, keepdims=True)


def _bn_add_relu_kernel(y_ref, x_ref, scale_ref, shift_ref, out_ref):
    """out = relu(bn2_apply(y) + identity_shortcut(x)) on one row tile."""
    out_ref[...] = jnp.maximum(
        y_ref[...] * scale_ref[...] + shift_ref[...] + x_ref[...], 0.0)


def _scale_shift(p_sum, p_sq, gamma, beta, W, C, count):
    """Finalize BN stats from per-tile partials; fold into per-channel scale/shift.

    Column w*C + c of a partial holds channel c's sum at width position w, so
    the channel total is a (W, C) reshape + sum.  All math is f32.
    TODO(synk): single-pass E[x^2]-E[x]^2 variance; use a two-pass / Welford
    reduction if channel means ever dominate the std.
    """
    s1 = jnp.sum(p_sum, axis=(0, 1)).reshape(W, C).sum(axis=0)   # (C,)
    s2 = jnp.sum(p_sq, axis=(0, 1)).reshape(W, C).sum(axis=0)
    mean = s1 / count
    var = s2 / count - mean * mean
    scale = gamma.astype(jnp.float32) * lax.rsqrt(var + EPS)
    shift = beta.astype(jnp.float32) - mean * scale
    wide = lambda v: jnp.tile(v.reshape(1, C), (1, W))           # col w*C+c -> v[c]
    return wide(scale), wide(shift)


def _vmem_limit_bytes(tile_rows, WC):
    tile = tile_rows * WC * 4
    weights = 3 * WC * WC * 2
    # Double-buffered activation tiles (in/out) + resident weights + in-kernel
    # working set + slack; cap below v7x's 64 MiB physical VMEM.
    est = 8 * tile + weights + (8 << 20)
    return int(min(max(est, 16 << 20), 48 << 20))


def basic_block_forward(x_nchw, w1, g1, b1, w2, g2, b2, *, tile_images=None):
    """out = relu(bn2(conv2(relu(bn1(conv1(x))))) + x)   (identity shortcut)."""
    N, C, H, W = x_nchw.shape
    Cout = w1.shape[3]
    assert w1.shape == (3, 3, C, Cout) and w2.shape == (3, 3, Cout, Cout)
    assert C == Cout, "identity shortcut requires in_planes == planes (stride 1)"

    WC = W * Cout
    if tile_images is None:
        tile_images = max(1, min(N, 256 // H))        # target ~256 rows / tile
    assert N % tile_images == 0, "N must be divisible by tile_images"
    n_tiles = N // tile_images
    tile_rows = tile_images * H                        # whole images per tile
    assert tile_rows % 8 == 0 or n_tiles == 1, "row tile must be a multiple of 8"

    # NCHW -> NHWC -> lane-dense (N*H, W*C) slab (free row-major reshape).
    # A full ResNet should stay in this slab layout between blocks and only
    # convert at model entry/exit.
    x_slab = jnp.transpose(x_nchw, (0, 2, 3, 1)).reshape(N * H, WC)
    x_slab = x_slab.astype(jnp.float32)
    wb1 = _band_weights(w1.astype(jnp.float32), W)     # (3*WC, WC) bf16
    wb2 = _band_weights(w2.astype(jnp.float32), W)
    count = float(N * H * W)

    row_spec = pl.BlockSpec((tile_rows, WC), lambda i: (i, 0))
    w_spec = pl.BlockSpec((3 * WC, WC), lambda i: (0, 0))       # DMA'd once
    ss_spec = pl.BlockSpec((1, WC), lambda i: (0, 0))           # DMA'd once
    stat_spec = pl.BlockSpec((1, 1, WC), lambda i: (i, 0, 0))   # per-tile partials
    cparams = pltpu.CompilerParams(
        dimension_semantics=("parallel",),                      # 2 TCs on v7x
        vmem_limit_bytes=_vmem_limit_bytes(tile_rows, WC))

    def conv_pass(act_slab, w_banded, scale, shift, apply_bn_relu):
        return pl.pallas_call(
            functools.partial(_conv_stats_kernel, H=H,
                              apply_bn_relu=apply_bn_relu),
            grid=(n_tiles,),
            in_specs=[row_spec, w_spec, ss_spec, ss_spec],
            out_specs=(row_spec, stat_spec, stat_spec),
            out_shape=(jax.ShapeDtypeStruct((N * H, WC), jnp.float32),
                       jax.ShapeDtypeStruct((n_tiles, 1, WC), jnp.float32),
                       jax.ShapeDtypeStruct((n_tiles, 1, WC), jnp.float32)),
            compiler_params=cparams,
        )(act_slab, w_banded, scale, shift)

    ident = jnp.ones((1, WC), jnp.float32)   # dummies, unused in pass 1
    zero = jnp.zeros((1, WC), jnp.float32)

    # Pass 1: conv1 + partial BN1 stats.
    y1, ps1, pq1 = conv_pass(x_slab, wb1, ident, zero, apply_bn_relu=False)
    sc1, sh1 = _scale_shift(ps1, pq1, g1, b1, W, Cout, count)
    # Pass 2: bn1-apply + relu + conv2 + partial BN2 stats (h1 never hits HBM).
    y2, ps2, pq2 = conv_pass(y1, wb2, sc1, sh1, apply_bn_relu=True)
    sc2, sh2 = _scale_shift(ps2, pq2, g2, b2, W, Cout, count)
    # Pass 3: bn2-apply + identity residual + relu.
    out_slab = pl.pallas_call(
        _bn_add_relu_kernel,
        grid=(n_tiles,),
        in_specs=[row_spec, row_spec, ss_spec, ss_spec],
        out_specs=row_spec,
        out_shape=jax.ShapeDtypeStruct((N * H, WC), jnp.float32),
        compiler_params=cparams,
    )(y2, x_slab, sc2, sh2)

    return jnp.transpose(out_slab.reshape(N, H, W, Cout), (0, 3, 1, 2))


def _reference_forward(x_nchw, w1, g1, b1, w2, g2, b2):
    """Plain-JAX reference with the same bf16-operand / f32-accumulate convs."""
    def conv(xh, w):
        return lax.conv_general_dilated(
            xh.astype(jnp.bfloat16), w.astype(jnp.bfloat16),
            window_strides=(1, 1), padding="SAME",
            dimension_numbers=("NHWC", "HWIO", "NHWC"),
            preferred_element_type=jnp.float32)

    def bn(y, g, b):
        mean = jnp.mean(y, axis=(0, 1, 2), keepdims=True)
        var = jnp.mean((y - mean) ** 2, axis=(0, 1, 2), keepdims=True)
        return (y - mean) * lax.rsqrt(var + EPS) * g + b

    xh = jnp.transpose(x_nchw, (0, 2, 3, 1)).astype(jnp.float32)
    h1 = jax.nn.relu(bn(conv(xh, w1), g1, b1))
    out = jax.nn.relu(bn(conv(h1, w2), g2, b2) + xh)
    return jnp.transpose(out, (0, 3, 1, 2))


if __name__ == "__main__":
    key = jax.random.PRNGKey(0)
    N, C, H, W = 2, 8, 16, 16          # in_planes == planes == 8, stride == 1
    planes = C

    k1, k2, k3, k4, k5 = jax.random.split(key, 5)
    x = jax.random.normal(k1, (N, C, H, W), jnp.float32)
    # deterministic synthetic params (HWIO conv weights; BN affine params)
    w1 = 0.1 * jax.random.normal(k2, (3, 3, C, planes), jnp.float32)
    w2 = 0.1 * jax.random.normal(k3, (3, 3, planes, planes), jnp.float32)
    g1 = 1.0 + 0.1 * jax.random.normal(k4, (planes,), jnp.float32)
    b1 = 0.1 * jax.random.normal(k5, (planes,), jnp.float32)
    g2 = jnp.ones((planes,), jnp.float32)     # nn.BatchNorm2d default init
    b2 = jnp.zeros((planes,), jnp.float32)

    # tile_images=1 -> grid of 2 row tiles, exercising the cross-tile BN path.
    fwd = jax.jit(functools.partial(basic_block_forward, tile_images=1))
    out = jax.block_until_ready(fwd(x, w1, g1, b1, w2, g2, b2))
    assert out.shape == (N, planes, H, W)

    ref = _reference_forward(x, w1, g1, b1, w2, g2, b2)
    assert jnp.allclose(out, ref, atol=1e-2, rtol=1e-2), float(
        jnp.max(jnp.abs(out - ref)))

    print("KERNEL_OK")
</pallas_src>

<mosaic_0001>
module attributes {stable_mosaic.version = 11 : i64} {
  func.func @_conv_stats_kernel(%arg0: i32, %arg1: memref<16x128xf32, #tpu.memory_space<vmem>>, %arg2: memref<384x128xbf16, #tpu.memory_space<vmem>>, %arg3: memref<1x128xf32, #tpu.memory_space<vmem>>, %arg4: memref<1x128xf32, #tpu.memory_space<vmem>>, %arg5: memref<16x128xf32, #tpu.memory_space<vmem>>, %arg6: memref<1x1x128xf32, #tpu.memory_space<vmem>>, %arg7: memref<1x1x128xf32, #tpu.memory_space<vmem>>) attributes {dimension_semantics = [#tpu.dimension_semantics<parallel>], iteration_bounds = array<i64: 2>, scalar_prefetch = 0 : i64, scratch_operands = 0 : i64, tpu.core_type = #tpu.core_type<tc>, window_params = [{transform_indices = @transform_0, window_bounds = array<i64: 16, 128>}, {pipeline_mode = #tpu.pipeline_mode<synchronous>, transform_indices = @transform_1, window_bounds = array<i64: 384, 128>}, {pipeline_mode = #tpu.pipeline_mode<synchronous>, transform_indices = @transform_2, window_bounds = array<i64: 1, 128>}, {pipeline_mode = #tpu.pipeline_mode<synchronous>, transform_indices = @transform_3, window_bounds = array<i64: 1, 128>}, {transform_indices = @transform_4, window_bounds = array<i64: 16, 128>}, {transform_indices = @transform_5, window_bounds = array<i64: 1, 1, 128>}, {transform_indices = @transform_6, window_bounds = array<i64: 1, 1, 128>}]} {
    %c0 = arith.constant 0 : index
    %c0_0 = arith.constant 0 : index
    %0 = vector.load %arg1[%c0, %c0_0] : memref<16x128xf32, #tpu.memory_space<vmem>>, vector<16x128xf32>
    %1 = tpu.iota {dimensions = array<i32: 0>} : vector<16x1xi32>
    %c16_i32 = arith.constant 16 : i32
    %c0_i32 = arith.constant 0 : i32
    %2 = arith.cmpi eq, %c16_i32, %c0_i32 : i32
    %c1_i32 = arith.constant 1 : i32
    %3 = arith.select %2, %c1_i32, %c16_i32 : i32
    %4 = vector.broadcast %3 : i32 to vector<16x1xi32>
    %5 = arith.remsi %1, %4 : vector<16x1xi32>
    %c0_i32_1 = arith.constant 0 : i32
    %6 = vector.broadcast %c0_i32_1 : i32 to vector<16x1xi32>
    %7 = arith.cmpi ne, %5, %6 : vector<16x1xi32>
    %c0_i32_2 = arith.constant 0 : i32
    %8 = vector.broadcast %c0_i32_2 : i32 to vector<16x1xi32>
    %9 = arith.cmpi slt, %5, %8 : vector<16x1xi32>
    %c0_i32_3 = arith.constant 0 : i32
    %10 = arith.cmpi slt, %3, %c0_i32_3 : i32
    %11 = vector.broadcast %10 : i1 to vector<16x1xi1>
    %12 = vector.broadcast %11 : vector<16x1xi1> to vector<16x1xi1>
    %13 = arith.xori %9, %12 : vector<16x1xi1>
    %14 = arith.andi %13, %7 : vector<16x1xi1>
    %15 = vector.broadcast %3 : i32 to vector<16x1xi32>
    %16 = arith.addi %5, %15 : vector<16x1xi32>
    %17 = arith.select %14, %16, %5 : vector<16x1xi1>, vector<16x1xi32>
    %c0_i32_4 = arith.constant 0 : i32
    %18 = vector.broadcast %c0_i32_4 : i32 to vector<16x1xi32>
    %19 = arith.cmpi eq, %17, %18 : vector<16x1xi32>
    %c1_i32_5 = arith.constant 1 : i32
    %20 = tpu.dynamic_rotate %0 by %c1_i32_5 dim 0 : vector<16x128xf32>, i32 -> vector<16x128xf32>
    %cst = arith.constant 0.000000e+00 : f32
    %21 = vector.shape_cast %19 : vector<16x1xi1> to vector<16x1xi1>
    %22 = vector.broadcast %21 : vector<16x1xi1> to vector<16x128xi1>
    %23 = vector.broadcast %cst : f32 to vector<16x128xf32>
    %24 = arith.select %22, %23, %20 : vector<16x128xi1>, vector<16x128xf32>
    %c15_i32 = arith.constant 15 : i32
    %25 = vector.broadcast %c15_i32 : i32 to vector<16x1xi32>
    %26 = arith.cmpi eq, %17, %25 : vector<16x1xi32>
    %c15_i32_6 = arith.constant 15 : i32
    %27 = tpu.dynamic_rotate %0 by %c15_i32_6 dim 0 : vector<16x128xf32>, i32 -> vector<16x128xf32>
    %cst_7 = arith.constant 0.000000e+00 : f32
    %28 = vector.shape_cast %26 : vector<16x1xi1> to vector<16x1xi1>
    %29 = vector.broadcast %28 : vector<16x1xi1> to vector<16x128xi1>
    %30 = vector.broadcast %cst_7 : f32 to vector<16x128xf32>
    %31 = arith.select %29, %30, %27 : vector<16x128xi1>, vector<16x128xf32>
    %32 = tpu.concatenate %24, %0, %31 in 1 : vector<16x128xf32>, vector<16x128xf32>, vector<16x128xf32> -> vector<16x384xf32>
    %33 = arith.truncf %32 : vector<16x384xf32> to vector<16x384xbf16>
    %c0_8 = arith.constant 0 : index
    %c0_9 = arith.constant 0 : index
    %34 = vector.load %arg2[%c0_8, %c0_9] : memref<384x128xbf16, #tpu.memory_space<vmem>>, vector<384x128xbf16>
    %cst_10 = arith.constant dense<0.000000e+00> : vector<16x128xf32>
    %35 = tpu.matmul %33, %34, %cst_10 {dimension_numbers = #tpu.dot_dimension_numbers<[1], [0], [0], [1], [0, 0, 1, 1], [], []>} : vector<16x384xbf16>, vector<384x128xbf16>, vector<16x128xf32> -> vector<16x128xf32>
    %c0_11 = arith.constant 0 : index
    %c0_12 = arith.constant 0 : index
    %36 = vector.load %arg5[%c0_11, %c0_12] : memref<16x128xf32, #tpu.memory_space<vmem>>, vector<16x128xf32>
    tpu.vector_store %arg5[%c0_11, %c0_12], %35 {strides = array<i32>} : memref<16x128xf32, #tpu.memory_space<vmem>>, vector<16x128xf32>,
    %cst_13 = arith.constant dense<0.000000e+00> : vector<128xf32>
    %37 = vector.multi_reduction <add>, %35, %cst_13 [0] : vector<16x128xf32> to vector<128xf32>
    %38 = vector.shape_cast %37 : vector<128xf32> to vector<1x128xf32>
    %c0_14 = arith.constant 0 : index
    %c0_15 = arith.constant 0 : index
    %c0_16 = arith.constant 0 : index
    %39 = vector.load %arg6[%c0_14, %c0_15, %c0_16] : memref<1x1x128xf32, #tpu.memory_space<vmem>>, vector<1x1x128xf32>
    %40 = vector.shape_cast %39 : vector<1x1x128xf32> to vector<1x128xf32>
    %41 = vector.shape_cast %38 : vector<1x128xf32> to vector<1x1x128xf32>
    tpu.vector_store %arg6[%c0_14, %c0_15, %c0_16], %41 {strides = array<i32>} : memref<1x1x128xf32, #tpu.memory_space<vmem>>, vector<1x1x128xf32>,
    %42 = arith.mulf %35, %35 : vector<16x128xf32>
    %cst_17 = arith.constant dense<0.000000e+00> : vector<128xf32>
    %43 = vector.multi_reduction <add>, %42, %cst_17 [0] : vector<16x128xf32> to vector<128xf32>
    %44 = vector.shape_cast %43 : vector<128xf32> to vector<1x128xf32>
    %c0_18 = arith.constant 0 : index
    %c0_19 = arith.constant 0 : index
    %c0_20 = arith.constant 0 : index
    %45 = vector.load %arg7[%c0_18, %c0_19, %c0_20] : memref<1x1x128xf32, #tpu.memory_space<vmem>>, vector<1x1x128xf32>
    %46 = vector.shape_cast %45 : vector<1x1x128xf32> to vector<1x128xf32>
    %47 = vector.shape_cast %44 : vector<1x128xf32> to vector<1x1x128xf32>
    tpu.vector_store %arg7[%c0_18, %c0_19, %c0_20], %47 {strides = array<i32>} : memref<1x1x128xf32, #tpu.memory_space<vmem>>, vector<1x1x128xf32>,
    return
  }
  func.func @transform_0(%arg0: i32) -> (i32, i32) {
    %c0_i32 = arith.constant 0 : i32
    %c0_i32_0 = arith.constant 0 : i32
    return %arg0, %c0_i32 : i32, i32
  }
  func.func @transform_1(%arg0: i32) -> (i32, i32) {
    %c0_i32 = arith.constant 0 : i32
    %c0_i32_0 = arith.constant 0 : i32
    %c0_i32_1 = arith.constant 0 : i32
    return %c0_i32, %c0_i32_0 : i32, i32
  }
  func.func @transform_2(%arg0: i32) -> (i32, i32) {
    %c0_i32 = arith.constant 0 : i32
    %c0_i32_0 = arith.constant 0 : i32
    %c0_i32_1 = arith.constant 0 : i32
    return %c0_i32, %c0_i32_0 : i32, i32
  }
  func.func @transform_3(%arg0: i32) -> (i32, i32) {
    %c0_i32 = arith.constant 0 : i32
    %c0_i32_0 = arith.constant 0 : i32
    %c0_i32_1 = arith.constant 0 : i32
    return %c0_i32, %c0_i32_0 : i32, i32
  }
  func.func @transform_4(%arg0: i32) -> (i32, i32) {
    %c0_i32 = arith.constant 0 : i32
    %c0_i32_0 = arith.constant 0 : i32
    return %arg0, %c0_i32 : i32, i32
  }
  func.func @transform_5(%arg0: i32) -> (i32, i32, i32) {
    %c0_i32 = arith.constant 0 : i32
    %c0_i32_0 = arith.constant 0 : i32
    %c0_i32_1 = arith.constant 0 : i32
    return %arg0, %c0_i32, %c0_i32_0 : i32, i32, i32
  }
  func.func @transform_6(%arg0: i32) -> (i32, i32, i32) {
    %c0_i32 = arith.constant 0 : i32
    %c0_i32_0 = arith.constant 0 : i32
    %c0_i32_1 = arith.constant 0 : i32
    return %arg0, %c0_i32, %c0_i32_0 : i32, i32, i32
  }
}

module attributes {stable_mosaic.version = 11 : i64} {
  func.func @_bn_add_relu_kernel(%arg0: i32, %arg1: memref<16x128xf32, #tpu.memory_space<vmem>>, %arg2: memref<16x128xf32, #tpu.memory_space<vmem>>, %arg3: memref<1x128xf32, #tpu.memory_space<vmem>>, %arg4: memref<1x128xf32, #tpu.memory_space<vmem>>, %arg5: memref<16x128xf32, #tpu.memory_space<vmem>>) attributes {dimension_semantics = [#tpu.dimension_semantics<parallel>], iteration_bounds = array<i64: 2>, scalar_prefetch = 0 : i64, scratch_operands = 0 : i64, tpu.core_type = #tpu.core_type<tc>, window_params = [{transform_indices = @transform_0, window_bounds = array<i64: 16, 128>}, {transform_indices = @transform_1, window_bounds = array<i64: 16, 128>}, {pipeline_mode = #tpu.pipeline_mode<synchronous>, transform_indices = @transform_2, window_bounds = array<i64: 1, 128>}, {pipeline_mode = #tpu.pipeline_mode<synchronous>, transform_indices = @transform_3, window_bounds = array<i64: 1, 128>}, {transform_indices = @transform_4, window_bounds = array<i64: 16, 128>}]} {
    %c0 = arith.constant 0 : index
    %c0_0 = arith.constant 0 : index
    %0 = vector.load %arg1[%c0, %c0_0] : memref<16x128xf32, #tpu.memory_space<vmem>>, vector<16x128xf32>
    %c0_1 = arith.constant 0 : index
    %c0_2 = arith.constant 0 : index
    %1 = vector.load %arg3[%c0_1, %c0_2] : memref<1x128xf32, #tpu.memory_space<vmem>>, vector<1x128xf32>
    %2 = vector.broadcast %1 : vector<1x128xf32> to vector<16x128xf32>
    %3 = arith.mulf %0, %2 : vector<16x128xf32>
    %c0_3 = arith.constant 0 : index
    %c0_4 = arith.constant 0 : index
    %4 = vector.load %arg4[%c0_3, %c0_4] : memref<1x128xf32, #tpu.memory_space<vmem>>, vector<1x128xf32>
    %5 = vector.broadcast %4 : vector<1x128xf32> to vector<16x128xf32>
    %6 = arith.addf %3, %5 : vector<16x128xf32>
    %c0_5 = arith.constant 0 : index
    %c0_6 = arith.constant 0 : index
    %7 = vector.load %arg2[%c0_5, %c0_6] : memref<16x128xf32, #tpu.memory_space<vmem>>, vector<16x128xf32>
    %8 = arith.addf %6, %7 : vector<16x128xf32>
    %cst = arith.constant 0.000000e+00 : f32
    %9 = vector.broadcast %cst : f32 to vector<16x128xf32>
    %10 = arith.maximumf %8, %9 : vector<16x128xf32>
    %c0_7 = arith.constant 0 : index
    %c0_8 = arith.constant 0 : index
    %11 = vector.load %arg5[%c0_7, %c0_8] : memref<16x128xf32, #tpu.memory_space<vmem>>, vector<16x128xf32>
    tpu.vector_store %arg5[%c0_7, %c0_8], %10 {strides = array<i32>} : memref<16x128xf32, #tpu.memory_space<vmem>>, vector<16x128xf32>,
    return
  }
  func.func @transform_0(%arg0: i32) -> (i32, i32) {
    %c0_i32 = arith.constant 0 : i32
    %c0_i32_0 = arith.constant 0 : i32
    return %arg0, %c0_i32 : i32, i32
  }
  func.func @transform_1(%arg0: i32) -> (i32, i32) {
    %c0_i32 = arith.constant 0 : i32
    %c0_i32_0 = arith.constant 0 : i32
    return %arg0, %c0_i32 : i32, i32
  }
  func.func @transform_2(%arg0: i32) -> (i32, i32) {
    %c0_i32 = arith.constant 0 : i32
    %c0_i32_0 = arith.constant 0 : i32
    %c0_i32_1 = arith.constant 0 : i32
    return %c0_i32, %c0_i32_0 : i32, i32
  }
  func.func @transform_3(%arg0: i32) -> (i32, i32) {
    %c0_i32 = arith.constant 0 : i32
    %c0_i32_0 = arith.constant 0 : i32
    %c0_i32_1 = arith.constant 0 : i32
    return %c0_i32, %c0_i32_0 : i32, i32
  }
  func.func @transform_4(%arg0: i32) -> (i32, i32) {
    %c0_i32 = arith.constant 0 : i32
    %c0_i32_0 = arith.constant 0 : i32
    return %arg0, %c0_i32 : i32, i32
  }
}

module attributes {stable_mosaic.version = 11 : i64} {
  func.func @_conv_stats_kernel(%arg0: i32, %arg1: memref<16x128xf32, #tpu.memory_space<vmem>>, %arg2: memref<384x128xbf16, #tpu.memory_space<vmem>>, %arg3: memref<1x128xf32, #tpu.memory_space<vmem>>, %arg4: memref<1x128xf32, #tpu.memory_space<vmem>>, %arg5: memref<16x128xf32, #tpu.memory_space<vmem>>, %arg6: memref<1x1x128xf32, #tpu.memory_space<vmem>>, %arg7: memref<1x1x128xf32, #tpu.memory_space<vmem>>) attributes {dimension_semantics = [#tpu.dimension_semantics<parallel>], iteration_bounds = array<i64: 2>, scalar_prefetch = 0 : i64, scratch_operands = 0 : i64, tpu.core_type = #tpu.core_type<tc>, window_params = [{transform_indices = @transform_0, window_bounds = array<i64: 16, 128>}, {pipeline_mode = #tpu.pipeline_mode<synchronous>, transform_indices = @transform_1, window_bounds = array<i64: 384, 128>}, {pipeline_mode = #tpu.pipeline_mode<synchronous>, transform_indices = @transform_2, window_bounds = array<i64: 1, 128>}, {pipeline_mode = #tpu.pipeline_mode<synchronous>, transform_indices = @transform_3, window_bounds = array<i64: 1, 128>}, {transform_indices = @transform_4, window_bounds = array<i64: 16, 128>}, {transform_indices = @transform_5, window_bounds = array<i64: 1, 1, 128>}, {transform_indices = @transform_6, window_bounds = array<i64: 1, 1, 128>}]} {
    %c0 = arith.constant 0 : index
    %c0_0 = arith.constant 0 : index
    %0 = vector.load %arg1[%c0, %c0_0] : memref<16x128xf32, #tpu.memory_space<vmem>>, vector<16x128xf32>
    %c0_1 = arith.constant 0 : index
    %c0_2 = arith.constant 0 : index
    %1 = vector.load %arg3[%c0_1, %c0_2] : memref<1x128xf32, #tpu.memory_space<vmem>>, vector<1x128xf32>
    %2 = vector.broadcast %1 : vector<1x128xf32> to vector<16x128xf32>
    %3 = arith.mulf %0, %2 : vector<16x128xf32>
    %c0_3 = arith.constant 0 : index
    %c0_4 = arith.constant 0 : index
    %4 = vector.load %arg4[%c0_3, %c0_4] : memref<1x128xf32, #tpu.memory_space<vmem>>, vector<1x128xf32>
    %5 = vector.broadcast %4 : vector<1x128xf32> to vector<16x128xf32>
    %6 = arith.addf %3, %5 : vector<16x128xf32>
    %cst = arith.constant 0.000000e+00 : f32
    %7 = vector.broadcast %cst : f32 to vector<16x128xf32>
    %8 = arith.maximumf %6, %7 : vector<16x128xf32>
    %9 = tpu.iota {dimensions = array<i32: 0>} : vector<16x1xi32>
    %c16_i32 = arith.constant 16 : i32
    %c0_i32 = arith.constant 0 : i32
    %10 = arith.cmpi eq, %c16_i32, %c0_i32 : i32
    %c1_i32 = arith.constant 1 : i32
    %11 = arith.select %10, %c1_i32, %c16_i32 : i32
    %12 = vector.broadcast %11 : i32 to vector<16x1xi32>
    %13 = arith.remsi %9, %12 : vector<16x1xi32>
    %c0_i32_5 = arith.constant 0 : i32
    %14 = vector.broadcast %c0_i32_5 : i32 to vector<16x1xi32>
    %15 = arith.cmpi ne, %13, %14 : vector<16x1xi32>
    %c0_i32_6 = arith.constant 0 : i32
    %16 = vector.broadcast %c0_i32_6 : i32 to vector<16x1xi32>
    %17 = arith.cmpi slt, %13, %16 : vector<16x1xi32>
    %c0_i32_7 = arith.constant 0 : i32
    %18 = arith.cmpi slt, %11, %c0_i32_7 : i32
    %19 = vector.broadcast %18 : i1 to vector<16x1xi1>
    %20 = vector.broadcast %19 : vector<16x1xi1> to vector<16x1xi1>
    %21 = arith.xori %17, %20 : vector<16x1xi1>
    %22 = arith.andi %21, %15 : vector<16x1xi1>
    %23 = vector.broadcast %11 : i32 to vector<16x1xi32>
    %24 = arith.addi %13, %23 : vector<16x1xi32>
    %25 = arith.select %22, %24, %13 : vector<16x1xi1>, vector<16x1xi32>
    %c0_i32_8 = arith.constant 0 : i32
    %26 = vector.broadcast %c0_i32_8 : i32 to vector<16x1xi32>
    %27 = arith.cmpi eq, %25, %26 : vector<16x1xi32>
    %c1_i32_9 = arith.constant 1 : i32
    %28 = tpu.dynamic_rotate %8 by %c1_i32_9 dim 0 : vector<16x128xf32>, i32 -> vector<16x128xf32>
    %cst_10 = arith.constant 0.000000e+00 : f32
    %29 = vector.shape_cast %27 : vector<16x1xi1> to vector<16x1xi1>
    %30 = vector.broadcast %29 : vector<16x1xi1> to vector<16x128xi1>
    %31 = vector.broadcast %cst_10 : f32 to vector<16x128xf32>
    %32 = arith.select %30, %31, %28 : vector<16x128xi1>, vector<16x128xf32>
    %c15_i32 = arith.constant 15 : i32
    %33 = vector.broadcast %c15_i32 : i32 to vector<16x1xi32>
    %34 = arith.cmpi eq, %25, %33 : vector<16x1xi32>
    %c15_i32_11 = arith.constant 15 : i32
    %35 = tpu.dynamic_rotate %8 by %c15_i32_11 dim 0 : vector<16x128xf32>, i32 -> vector<16x128xf32>
    %cst_12 = arith.constant 0.000000e+00 : f32
    %36 = vector.shape_cast %34 : vector<16x1xi1> to vector<16x1xi1>
    %37 = vector.broadcast %36 : vector<16x1xi1> to vector<16x128xi1>
    %38 = vector.broadcast %cst_12 : f32 to vector<16x128xf32>
    %39 = arith.select %37, %38, %35 : vector<16x128xi1>, vector<16x128xf32>
    %40 = tpu.concatenate %32, %8, %39 in 1 : vector<16x128xf32>, vector<16x128xf32>, vector<16x128xf32> -> vector<16x384xf32>
    %41 = arith.truncf %40 : vector<16x384xf32> to vector<16x384xbf16>
    %c0_13 = arith.constant 0 : index
    %c0_14 = arith.constant 0 : index
    %42 = vector.load %arg2[%c0_13, %c0_14] : memref<384x128xbf16, #tpu.memory_space<vmem>>, vector<384x128xbf16>
    %cst_15 = arith.constant dense<0.000000e+00> : vector<16x128xf32>
    %43 = tpu.matmul %41, %42, %cst_15 {dimension_numbers = #tpu.dot_dimension_numbers<[1], [0], [0], [1], [0, 0, 1, 1], [], []>} : vector<16x384xbf16>, vector<384x128xbf16>, vector<16x128xf32> -> vector<16x128xf32>
    %c0_16 = arith.constant 0 : index
    %c0_17 = arith.constant 0 : index
    %44 = vector.load %arg5[%c0_16, %c0_17] : memref<16x128xf32, #tpu.memory_space<vmem>>, vector<16x128xf32>
    tpu.vector_store %arg5[%c0_16, %c0_17], %43 {strides = array<i32>} : memref<16x128xf32, #tpu.memory_space<vmem>>, vector<16x128xf32>,
    %cst_18 = arith.constant dense<0.000000e+00> : vector<128xf32>
    %45 = vector.multi_reduction <add>, %43, %cst_18 [0] : vector<16x128xf32> to vector<128xf32>
    %46 = vector.shape_cast %45 : vector<128xf32> to vector<1x128xf32>
    %c0_19 = arith.constant 0 : index
    %c0_20 = arith.constant 0 : index
    %c0_21 = arith.constant 0 : index
    %47 = vector.load %arg6[%c0_19, %c0_20, %c0_21] : memref<1x1x128xf32, #tpu.memory_space<vmem>>, vector<1x1x128xf32>
    %48 = vector.shape_cast %47 : vector<1x1x128xf32> to vector<1x128xf32>
    %49 = vector.shape_cast %46 : vector<1x128xf32> to vector<1x1x128xf32>
    tpu.vector_store %arg6[%c0_19, %c0_20, %c0_21], %49 {strides = array<i32>} : memref<1x1x128xf32, #tpu.memory_space<vmem>>, vector<1x1x128xf32>,
    %50 = arith.mulf %43, %43 : vector<16x128xf32>
    %cst_22 = arith.constant dense<0.000000e+00> : vector<128xf32>
    %51 = vector.multi_reduction <add>, %50, %cst_22 [0] : vector<16x128xf32> to vector<128xf32>
    %52 = vector.shape_cast %51 : vector<128xf32> to vector<1x128xf32>
    %c0_23 = arith.constant 0 : index
    %c0_24 = arith.constant 0 : index
    %c0_25 = arith.constant 0 : index
    %53 = vector.load %arg7[%c0_23, %c0_24, %c0_25] : memref<1x1x128xf32, #tpu.memory_space<vmem>>, vector<1x1x128xf32>
    %54 = vector.shape_cast %53 : vector<1x1x128xf32> to vector<1x128xf32>
    %55 = vector.shape_cast %52 : vector<1x128xf32> to vector<1x1x128xf32>
    tpu.vector_store %arg7[%c0_23, %c0_24, %c0_25], %55 {strides = array<i32>} : memref<1x1x128xf32, #tpu.memory_space<vmem>>, vector<1x1x128xf32>,
    return
  }
  func.func @transform_0(%arg0: i32) -> (i32, i32) {
    %c0_i32 = arith.constant 0 : i32
    %c0_i32_0 = arith.constant 0 : i32
    return %arg0, %c0_i32 : i32, i32
  }
  func.func @transform_1(%arg0: i32) -> (i32, i32) {
    %c0_i32 = arith.constant 0 : i32
    %c0_i32_0 = arith.constant 0 : i32
    %c0_i32_1 = arith.constant 0 : i32
    return %c0_i32, %c0_i32_0 : i32, i32
  }
  func.func @transform_2(%arg0: i32) -> (i32, i32) {
    %c0_i32 = arith.constant 0 : i32
    %c0_i32_0 = arith.constant 0 : i32
    %c0_i32_1 = arith.constant 0 : i32
    return %c0_i32, %c0_i32_0 : i32, i32
  }
  func.func @transform_3(%arg0: i32) -> (i32, i32) {
    %c0_i32 = arith.constant 0 : i32
    %c0_i32_0 = arith.constant 0 : i32
    %c0_i32_1 = arith.constant 0 : i32
    return %c0_i32, %c0_i32_0 : i32, i32
  }
  func.func @transform_4(%arg0: i32) -> (i32, i32) {
    %c0_i32 = arith.constant 0 : i32
    %c0_i32_0 = arith.constant 0 : i32
    return %arg0, %c0_i32 : i32, i32
  }
  func.func @transform_5(%arg0: i32) -> (i32, i32, i32) {
    %c0_i32 = arith.constant 0 : i32
    %c0_i32_0 = arith.constant 0 : i32
    %c0_i32_1 = arith.constant 0 : i32
    return %arg0, %c0_i32, %c0_i32_0 : i32, i32, i32
  }
  func.func @transform_6(%arg0: i32) -> (i32, i32, i32) {
    %c0_i32 = arith.constant 0 : i32
    %c0_i32_0 = arith.constant 0 : i32
    %c0_i32_1 = arith.constant 0 : i32
    return %arg0, %c0_i32, %c0_i32_0 : i32, i32, i32
  }
}

</mosaic_0001>

<llo_original>
// kernel: basic_block_forward.3
$region0: #{basic_block_forward.3}
  #allocation0 [shape = 'u32[]', space=smem, size = 0x4, offset = 0x4, fixed_abs, tag = 'smem constant byte address 0x4 - core index']
  #allocation1 [shape = 'u32[72,128]{1,0:T(1,128)}', space=vmem, size = 0x9000, scoped, tag = 'internal scratch']
  %s0 = inlined_call_operand.vmem [shape: f32[32,128], index: 0, kind: input, shape index: {}]
  %s1 = inlined_call_operand.vmem [shape: bf16[384,128], index: 1, kind: input, shape index: {}]
  %s2 = inlined_call_operand.vmem [shape: f32[1,128], index: 2, kind: input, shape index: {}]
  %s3 = inlined_call_operand.vmem [shape: f32[1,128], index: 3, kind: input, shape index: {}]
  %s4 = inlined_call_operand.vmem [shape: f32[32,128], index: 4, kind: output, shape index: {0}]
  %s5 = inlined_call_operand.vmem [shape: f32[2,1,128], index: 5, kind: output, shape index: {1}]
  %s6 = inlined_call_operand.vmem [shape: f32[2,1,128], index: 6, kind: output, shape index: {2}]
  %7 = xla_tuple %s4, %s5, %s6
  %s8 = sld [smem:[#allocation0]]
  $region65: #{basic_block_forward.3} parent=0
    _
  %s10 = ssub.s32 1, %s8
  %s11 = scalar_select 0, %s10, %s8
  loop: start=0, step=1, limit=4
  $region2: #{basic_block_forward.3} parent=0 // loop_pre_header
    _
  $region3: #{basic_block_forward.3} parent=0 // loop_header
    %s13 = sphi 0, %s17
    %p14 = scmp.ge.s32.totalorder %s13, 4
    %s23 = sphi 0, %s25
    %s26 = sphi 0, %s23
    %s27 = sphi 0, %s26
    %s43 = sphi 0, %s27
    %s47 = sphi 0, %s47
    %s49 = sphi 0, %s47
    %s50 = sphi 0, %s49
    %s64 = sphi 0, %s50
    %s68 = sphi 0, %s68
    %s70 = sphi 0, %s68
    %s71 = sphi 0, %s70
    %s85 = sphi 0, %s71
    %s89 = sphi 0, %s89
    %s91 = sphi 0, %s89
    %s92 = sphi 0, %s91
    %s106 = sphi 0, %s92
    %s112 = sphi 0, %s114
    %s115 = sphi 0, %s112
    %s116 = sphi 0, %s115
    %s132 = sphi 0, %s116
    %s138 = sphi 0, %s140
    %s141 = sphi 0, %s138
    %s142 = sphi 0, %s141
    %s158 = sphi 0, %s142
    %s164 = sphi 0, %s166
    %s167 = sphi 0, %s164
    %s168 = sphi 0, %s167
    %s184 = sphi 0, %s168
  $region4: #{basic_block_forward.3} parent=0 // loop_header_branch
    %16 = sbr.rel (%p14) target = $region8
  $region5: #{basic_block_forward.3} parent=0 // loop_body
    %s18 = ssub.s32 %s13, 1
    %s19 = ssub.s32 %s13, 2
    %s20 = sadd.s32 %s13, 1
    %s21 = ssub.s32 %s13, %s20
    %p22 = scmp.eq.s32.totalorder %s21, 0
    %s24 = sadd.s32 %s23, 1
    %s25 = scalar_select %p22, %s23, %s24
    %p28 = pneg %p22
    %p29 = scmp.eq.s32.totalorder %s13, 1
    %p30 = por %p28, %p29
    %p31 = scmp.ne.s32.totalorder %s23, %s26
    %p32 = scmp.eq.s32.totalorder %s13, 0
    %p33 = por %p31, %p32
    %p34 = scmp.ne.s32.totalorder %s23, %s26
    %p35 = scmp.eq.s32.totalorder %s18, 1
    %p36 = por %p34, %p35
    %p37 = scmp.ne.s32.totalorder %s26, %s27
    %p38 = scmp.eq.s32.totalorder %s18, 0
    %p39 = por %p37, %p38
    %p40 = scmp.ne.s32.totalorder %s26, %s27
    %p41 = scmp.eq.s32.totalorder %s19, 1
    %p42 = por %p40, %p41
    %p44 = scmp.ne.s32.totalorder %s27, %s43
    %p45 = scmp.eq.s32.totalorder %s19, 0
    %p46 = por %p44, %p45
    %s48 = sadd.s32 %s47, 1
    %p51 = scmp.eq.s32.totalorder %s13, 1
    %p52 = scmp.ne.s32.totalorder %s47, %s49
    %p53 = scmp.eq.s32.totalorder %s13, 0
    %p54 = por %p52, %p53
    %p55 = scmp.ne.s32.totalorder %s47, %s49
    %p56 = scmp.eq.s32.totalorder %s18, 1
    %p57 = por %p55, %p56
    %p58 = scmp.ne.s32.totalorder %s49, %s50
    %p59 = scmp.eq.s32.totalorder %s18, 0
    %p60 = por %p58, %p59
    %p61 = scmp.ne.s32.totalorder %s49, %s50
    %p62 = scmp.eq.s32.totalorder %s19, 1
    %p63 = por %p61, %p62
    %p65 = scmp.ne.s32.totalorder %s50, %s64
    %p66 = scmp.eq.s32.totalorder %s19, 0
    %p67 = por %p65, %p66
    %s69 = sadd.s32 %s68, 1
    %p72 = scmp.eq.s32.totalorder %s13, 1
    %p73 = scmp.ne.s32.totalorder %s68, %s70
    %p74 = scmp.eq.s32.totalorder %s13, 0
    %p75 = por %p73, %p74
    %p76 = scmp.ne.s32.totalorder %s68, %s70
    %p77 = scmp.eq.s32.totalorder %s18, 1
    %p78 = por %p76, %p77
    %p79 = scmp.ne.s32.totalorder %s70, %s71
    %p80 = scmp.eq.s32.totalorder %s18, 0
    %p81 = por %p79, %p80
    %p82 = scmp.ne.s32.totalorder %s70, %s71
    %p83 = scmp.eq.s32.totalorder %s19, 1
    %p84 = por %p82, %p83
    %p86 = scmp.ne.s32.totalorder %s71, %s85
    %p87 = scmp.eq.s32.totalorder %s19, 0
    %p88 = por %p86, %p87
    %s90 = sadd.s32 %s89, 1
    %p93 = scmp.eq.s32.totalorder %s13, 1
    %p94 = scmp.ne.s32.totalorder %s89, %s91
    %p95 = scmp.eq.s32.totalorder %s13, 0
    %p96 = por %p94, %p95
    %p97 = scmp.ne.s32.totalorder %s89, %s91
    %p98 = scmp.eq.s32.totalorder %s18, 1
    %p99 = por %p97, %p98
    %p100 = scmp.ne.s32.totalorder %s91, %s92
    %p101 = scmp.eq.s32.totalorder %s18, 0
    %p102 = por %p100, %p101
    %p103 = scmp.ne.s32.totalorder %s91, %s92
    %p104 = scmp.eq.s32.totalorder %s19, 1
    %p105 = por %p103, %p104
    %p107 = scmp.ne.s32.totalorder %s92, %s106
    %p108 = scmp.eq.s32.totalorder %s19, 0
    %p109 = por %p107, %p108
    %s110 = ssub.s32 %s13, %s20
    %p111 = scmp.eq.s32.totalorder %s110, 0
    %s113 = sadd.s32 %s112, 1
    %s114 = scalar_select %p111, %s112, %s113
    %p117 = pneg %p111
    %p118 = scmp.eq.s32.totalorder %s13, 1
    %p119 = por %p117, %p118
    %p120 = scmp.ne.s32.totalorder %s112, %s115
    %p121 = scmp.eq.s32.totalorder %s13, 0
    %p122 = por %p120, %p121
    %p123 = scmp.ne.s32.totalorder %s112, %s115
    %p124 = scmp.eq.s32.totalorder %s18, 1
    %p125 = por %p123, %p124
    %p126 = scmp.ne.s32.totalorder %s115, %s116
    %p127 = scmp.eq.s32.totalorder %s18, 0
    %p128 = por %p126, %p127
    %p129 = scmp.ne.s32.totalorder %s115, %s116
    %p130 = scmp.eq.s32.totalorder %s19, 1
    %p131 = por %p129, %p130
    %p133 = scmp.ne.s32.totalorder %s116, %s132
    %p134 = scmp.eq.s32.totalorder %s19, 0
    %p135 = por %p133, %p134
    %s136 = ssub.s32 %s13, %s20
    %p137 = scmp.eq.s32.totalorder %s136, 0
    %s139 = sadd.s32 %s138, 1
    %s140 = scalar_select %p137, %s138, %s139
    %p143 = pneg %p137
    %p144 = scmp.eq.s32.totalorder %s13, 1
    %p145 = por %p143, %p144
    %p146 = scmp.ne.s32.totalorder %s138, %s141
    %p147 = scmp.eq.s32.totalorder %s13, 0
    %p148 = por %p146, %p147
    %p149 = scmp.ne.s32.totalorder %s138, %s141
    %p150 = scmp.eq.s32.totalorder %s18, 1
    %p151 = por %p149, %p150
    %p152 = scmp.ne.s32.totalorder %s141, %s142
    %p153 = scmp.eq.s32.totalorder %s18, 0
    %p154 = por %p152, %p153
    %p155 = scmp.ne.s32.totalorder %s141, %s142
    %p156 = scmp.eq.s32.totalorder %s19, 1
    %p157 = por %p155, %p156
    %p159 = scmp.ne.s32.totalorder %s142, %s158
    %p160 = scmp.eq.s32.totalorder %s19, 0
    %p161 = por %p159, %p160
    %s162 = ssub.s32 %s13, %s20
    %p163 = scmp.eq.s32.totalorder %s162, 0
    %s165 = sadd.s32 %s164, 1
    %s166 = scalar_select %p163, %s164, %s165
    %p169 = pneg %p163
    %p170 = scmp.eq.s32.totalorder %s13, 1
    %p171 = por %p169, %p170
    %p172 = scmp.ne.s32.totalorder %s164, %s167
    %p173 = scmp.eq.s32.totalorder %s13, 0
    %p174 = por %p172, %p173
    %p175 = scmp.ne.s32.totalorder %s164, %s167
    %p176 = scmp.eq.s32.totalorder %s18, 1
    %p177 = por %p175, %p176
    %p178 = scmp.ne.s32.totalorder %s167, %s168
    %p179 = scmp.eq.s32.totalorder %s18, 0
    %p180 = por %p178, %p179
    %p181 = scmp.ne.s32.totalorder %s167, %s168
    %p182 = scmp.eq.s32.totalorder %s19, 1
    %p183 = por %p181, %p182
    %p185 = scmp.ne.s32.totalorder %s168, %s184
    %p186 = scmp.eq.s32.totalorder %s19, 0
    %p187 = por %p185, %p186
    %p188 = scmp.le.s32.totalorder 1, %s13
    %p189 = scmp.lt.s32.totalorder %s13, 3
    %p190 = pnand %p188, %p189
    %p191 = pneg %p190
    // Predicated region
    $region9: #{basic_block_forward.3} parent=5 // pred_check
      _
    $region10: #{basic_block_forward.3} parent=5 // pred_check_branch
      %193 = sbr.rel (%p190) target = $region12
    $region11: #{basic_block_forward.3} parent=5 // pred_region
      %s194 = ssub.s32 %s13, 1
      // Predicated region
      $region13: #{basic_block_forward.3} parent=11 // pred_check
        %p195 = pneg %p60
      $region14: #{basic_block_forward.3} parent=11 // pred_check_branch
        %197 = sbr.rel (%p195) target = $region16
      $region15: #{basic_block_forward.3} parent=11 // pred_region
        _
      $region16: #{basic_block_forward.3} parent=11 // pred_fallthru
        _
      // Predicated region
      $region17: #{basic_block_forward.3} parent=11 // pred_check
        %p198 = pneg %p81
      $region18: #{basic_block_forward.3} parent=11 // pred_check_branch
        %200 = sbr.rel (%p198) target = $region20
      $region19: #{basic_block_forward.3} parent=11 // pred_region
        _
      $region20: #{basic_block_forward.3} parent=11 // pred_fallthru
        _
      // Predicated region
      $region21: #{basic_block_forward.3} parent=11 // pred_check
        %p201 = pneg %p102
      $region22: #{basic_block_forward.3} parent=11 // pred_check_branch
        %203 = sbr.rel (%p201) target = $region24
      $region23: #{basic_block_forward.3} parent=11 // pred_region
        _
      $region24: #{basic_block_forward.3} parent=11 // pred_fallthru
        _
    $region12: #{basic_block_forward.3} parent=5 // pred_fallthru
      _
    %p204 = scmp.lt.s32.totalorder %s13, 2
    // Predicated region
    $region25: #{basic_block_forward.3} parent=5 // pred_check
      %p205 = pneg %p204
    $region26: #{basic_block_forward.3} parent=5 // pred_check_branch
      %207 = sbr.rel (%p205) target = $region28
    $region27: #{basic_block_forward.3} parent=5 // pred_region
      // Predicated region
      $region29: #{basic_block_forward.3} parent=27 // pred_check
        %p208 = pneg %p33
      $region30: #{basic_block_forward.3} parent=27 // pred_check_branch
        %210 = sbr.rel (%p208) target = $region32
      $region31: #{basic_block_forward.3} parent=27 // pred_region
        %s211 = smul.u32 2, %s13
        %p212 = scmp.lt.s32.totalorder %s211, 3
        %s213 = scalar_select %p212, %s211, 3
        %s214 = smul.addr %s213, 8
        %s215 = scalar_lea.vmem %s0, %s214
        %s216 = smul.u32 2, %s13
      $region32: #{basic_block_forward.3} parent=27 // pred_fallthru
        _
    $region28: #{basic_block_forward.3} parent=5 // pred_fallthru
      _
    %p217 = scmp.le.s32.totalorder 1, %s13
    %p218 = scmp.lt.s32.totalorder %s13, 3
    %p219 = pnand %p217, %p218
    %p220 = pneg %p219
    // Predicated region
    $region33: #{basic_block_forward.3} parent=5 // pred_check
      _
    $region34: #{basic_block_forward.3} parent=5 // pred_check_branch
      %222 = sbr.rel (%p219) target = $region36
    $region35: #{basic_block_forward.3} parent=5 // pred_region
      %s223 = ssub.s32 %s13, 1
      %s224 = smul.u32 2, %s18
      %p225 = scmp.lt.s32.totalorder %s224, 3
      %s226 = scalar_select %p225, %s224, 3
      %s227 = smul.addr %s226, 8
      %s228 = scalar_lea.vmem %s0, %s227
      %p229 = pneg %p39
      %p230 = pneg %p36
      %p231 = pneg %p60
      %p232 = pneg %p57
      %p233 = pneg %p81
      %p234 = pneg %p78
      %p235 = pneg %p102
      %p236 = pneg %p99
      %p237 = pneg %p128
      %p238 = pneg %p125
      %s239 = smul.u32 2, %s18
      %p240 = scmp.lt.s32.totalorder %s239, 3
      %s241 = scalar_select %p240, %s239, 3
      %s242 = smul.addr %s241, 8
      %s243 = scalar_lea.vmem %s4, %s242
      %p244 = pneg %p154
      %p245 = pneg %p151
      %p246 = scmp.lt.s32.totalorder %s18, 1
      %s247 = scalar_select %p246, %s18, 1
      %s248 = scalar_lea.vmem %s5, %s247
      %p249 = pneg %p180
      %p250 = pneg %p177
      %p251 = scmp.lt.s32.totalorder %s18, 1
      %s252 = scalar_select %p251, %s18, 1
      %s253 = scalar_lea.vmem %s6, %s252
      %s254 = smul.u32 2, %s18
      %p255 = scmp.lt.s32.totalorder %s254, 3
      %s256 = scalar_select %p255, %s254, 3
      %s257 = smul.addr %s256, 8
      %s258 = scalar_lea.vmem %s0, %s257
      %s259 = smul.u32 2, %s18
      %s260 = smul.u32 2, %s18
      %p261 = scmp.lt.s32.totalorder %s260, 3
      %s262 = scalar_select %p261, %s260, 3
      %s263 = smul.addr %s262, 8
      %s264 = scalar_lea.vmem %s4, %s263
      %s265 = smul.u32 2, %s18
      %p266 = scmp.lt.s32.totalorder %s18, 1
      %s267 = scalar_select %p266, %s18, 1
      %s268 = scalar_lea.vmem %s5, %s267
      %p269 = scmp.lt.s32.totalorder %s18, 1
      %s270 = scalar_select %p269, %s18, 1
      %s271 = scalar_lea.vmem %s6, %s270
      %v272 = vld [vmem:[%s258] sm:$0xff]
      %v273 = vld [vmem:[%s258 + $0x8] sm:$0xff]
      %v274 = vlaneseq
      %v275 = vshrl.u32 %v274, 7
      %v276 = vadd.s32 %v275, 8
      %vm277 = vcmp.lt.s32.totalorder %v275, 0
      %v278 = vsub.s32 0, %v275
      %v279 = vsel %vm277, %v278, %v275
      %v280 = vshrl.u32 %v279, 4
      %v281 = vand.u32 %v279, 15
      %v282 = vsub.s32 0, %v281
      %v283 = vsel %vm277, %v282, %v281
      %vm284 = vcmp.lt.s32.totalorder %v276, 0
      %v285 = vsub.s32 0, %v276
      %v286 = vsel %vm284, %v285, %v276
      %v287 = vshrl.u32 %v286, 4
      %v288 = vand.u32 %v286, 15
      %v289 = vsub.s32 0, %v288
      %v290 = vsel %vm284, %v289, %v288
      %vm291 = vcmp.ne.s32.totalorder %v283, 0
      %vm292 = vcmp.ne.s32.totalorder %v290, 0
      %vm293 = vcmp.lt.s32.totalorder %v283, 0
      %vm294 = vcmp.lt.s32.totalorder %v290, 0
      %vm295 = vmand %vm293, %vm291
      %vm296 = vmand %vm294, %vm292
      %v297 = vadd.s32 %v283, 16
      %v298 = vadd.s32 %v290, 16
      %v299 = vsel %vm295, %v297, %v283
      %v300 = vsel %vm296, %v298, %v290
      %vm301 = vcmp.eq.s32.totalorder %v299, 0
      %vm302 = vcmp.eq.s32.totalorder %v300, 0
      %v303 = vrot.slane %v272, 7
      %v304 = vrot.slane %v273, 7
      %vm305 = vcmp.lt.s32.totalorder %v275, 1
      %v306 = vsel %vm305, %v303, %v304
      %v307 = vsel %vm305, %v304, %v303
      %v308 = vsel %vm301, 1, 0
      %v309 = vsel %vm302, 1, 0
      %vm310 = vcmp.eq.s32.totalorder %v308, 1
      %vm311 = vcmp.eq.s32.totalorder %v309, 1
      %v312 = vsel %vm310, 0.0, %v307
      %v313 = vsel %vm311, 0.0, %v306
      %vm314 = vcmp.eq.s32.totalorder %v299, 15
      %vm315 = vcmp.eq.s32.totalorder %v300, 15
      %v316 = vrot.slane %v272, 1
      %v317 = vrot.slane %v273, 1
      %vm318 = vcmp.lt.s32.totalorder %v275, 7
      %v319 = vsel %vm318, %v316, %v317
      %v320 = vsel %vm318, %v317, %v316
      %v321 = vsel %vm314, 1, 0
      %v322 = vsel %vm315, 1, 0
      %vm323 = vcmp.eq.s32.totalorder %v321, 1
      %vm324 = vcmp.eq.s32.totalorder %v322, 1
      %v325 = vsel %vm323, 0.0, %v319
      %v326 = vsel %vm324, 0.0, %v320
      %v327 = vpack.c.bf16 %v313, %v312
      %v328 = vpack.c.bf16 %v273, %v272
      %v329 = vpack.c.bf16 %v326, %v325
      %v330 = vld [vmem:[%s1] sm:$0xf]
      %v331 = vld [vmem:[%s1 + $0x4] sm:$0xf]
      %v332 = vld [vmem:[%s1 + $0x8] sm:$0xf]
      %v333 = vld [vmem:[%s1 + $0xc] sm:$0xf]
      %v334 = vld [vmem:[%s1 + $0x10] sm:$0xf]
      %v335 = vld [vmem:[%s1 + $0x14] sm:$0xf]
      %v336 = vld [vmem:[%s1 + $0x18] sm:$0xf]
      %v337 = vld [vmem:[%s1 + $0x1c] sm:$0xf]
      %v338 = vld [vmem:[%s1 + $0x20] sm:$0xf]
      %v339 = vld [vmem:[%s1 + $0x24] sm:$0xf]
      %v340 = vld [vmem:[%s1 + $0x28] sm:$0xf]
      %v341 = vld [vmem:[%s1 + $0x2c] sm:$0xf]
      %v342 = vld [vmem:[%s1 + $0x30] sm:$0xf]
      %v343 = vld [vmem:[%s1 + $0x34] sm:$0xf]
      %v344 = vld [vmem:[%s1 + $0x38] sm:$0xf]
      %v345 = vld [vmem:[%s1 + $0x3c] sm:$0xf]
      %v346 = vld [vmem:[%s1 + $0x40] sm:$0xf]
      %v347 = vld [vmem:[%s1 + $0x44] sm:$0xf]
      %v348 = vld [vmem:[%s1 + $0x48] sm:$0xf]
      %v349 = vld [vmem:[%s1 + $0x4c] sm:$0xf]
      %v350 = vld [vmem:[%s1 + $0x50] sm:$0xf]
      %v351 = vld [vmem:[%s1 + $0x54] sm:$0xf]
      %v352 = vld [vmem:[%s1 + $0x58] sm:$0xf]
      %v353 = vld [vmem:[%s1 + $0x5c] sm:$0xf]
      %v354 = vld [vmem:[%s1 + $0x60] sm:$0xf]
      %v355 = vld [vmem:[%s1 + $0x64] sm:$0xf]
      %v356 = vld [vmem:[%s1 + $0x68] sm:$0xf]
      %v357 = vld [vmem:[%s1 + $0x6c] sm:$0xf]
      %v358 = vld [vmem:[%s1 + $0x70] sm:$0xf]
      %v359 = vld [vmem:[%s1 + $0x74] sm:$0xf]
      %v360 = vld [vmem:[%s1 + $0x78] sm:$0xf]
      %v361 = vld [vmem:[%s1 + $0x7c] sm:$0xf]
      %v362 = vld [vmem:[%s1 + $0x80] sm:$0xf]
      %v363 = vld [vmem:[%s1 + $0x84] sm:$0xf]
      %v364 = vld [vmem:[%s1 + $0x88] sm:$0xf]
      %v365 = vld [vmem:[%s1 + $0x8c] sm:$0xf]
      %v366 = vld [vmem:[%s1 + $0x90] sm:$0xf]
      %v367 = vld [vmem:[%s1 + $0x94] sm:$0xf]
      %v368 = vld [vmem:[%s1 + $0x98] sm:$0xf]
      %v369 = vld [vmem:[%s1 + $0x9c] sm:$0xf]
      %v370 = vld [vmem:[%s1 + $0xa0] sm:$0xf]
      %v371 = vld [vmem:[%s1 + $0xa4] sm:$0xf]
      %v372 = vld [vmem:[%s1 + $0xa8] sm:$0xf]
      %v373 = vld [vmem:[%s1 + $0xac] sm:$0xf]
      %v374 = vld [vmem:[%s1 + $0xb0] sm:$0xf]
      %v375 = vld [vmem:[%s1 + $0xb4] sm:$0xf]
      %v376 = vld [vmem:[%s1 + $0xb8] sm:$0xf]
      %v377 = vld [vmem:[%s1 + $0xbc] sm:$0xf]
      %v426 = vunpack.c.l.b16 %v330
      %v427 = vunpack.c.l.b16 %v331
      %v428 = vunpack.c.l.b16 %v332
      %v429 = vunpack.c.l.b16 %v333
      %v430 = vunpack.c.l.b16 %v334
      %v431 = vunpack.c.l.b16 %v335
      %v432 = vunpack.c.l.b16 %v336
      %v433 = vunpack.c.l.b16 %v337
      %v434 = vunpack.c.l.b16 %v338
      %v435 = vunpack.c.l.b16 %v339
      %v436 = vunpack.c.l.b16 %v340
      %v437 = vunpack.c.l.b16 %v341
      %v438 = vunpack.c.l.b16 %v342
      %v439 = vunpack.c.l.b16 %v343
      %v440 = vunpack.c.l.b16 %v344
      %v441 = vunpack.c.l.b16 %v345
      %v442 = vunpack.c.l.b16 %v346
      %v443 = vunpack.c.l.b16 %v347
      %v444 = vunpack.c.l.b16 %v348
      %v445 = vunpack.c.l.b16 %v349
      %v446 = vunpack.c.l.b16 %v350
      %v447 = vunpack.c.l.b16 %v351
      %v448 = vunpack.c.l.b16 %v352
      %v449 = vunpack.c.l.b16 %v353
      %v450 = vunpack.c.l.b16 %v354
      %v451 = vunpack.c.l.b16 %v355
      %v452 = vunpack.c.l.b16 %v356
      %v453 = vunpack.c.l.b16 %v357
      %v454 = vunpack.c.l.b16 %v358
      %v455 = vunpack.c.l.b16 %v359
      %v456 = vunpack.c.l.b16 %v360
      %v457 = vunpack.c.l.b16 %v361
      %v458 = vunpack.c.l.b16 %v362
      %v459 = vunpack.c.l.b16 %v363
      %v460 = vunpack.c.l.b16 %v364
      %v461 = vunpack.c.l.b16 %v365
      %v462 = vunpack.c.l.b16 %v366
      %v463 = vunpack.c.l.b16 %v367
      %v464 = vunpack.c.l.b16 %v368
      %v465 = vunpack.c.l.b16 %v369
      %v466 = vunpack.c.l.b16 %v370
      %v467 = vunpack.c.l.b16 %v371
      %v468 = vunpack.c.l.b16 %v372
      %v469 = vunpack.c.l.b16 %v373
      %v470 = vunpack.c.l.b16 %v374
      %v471 = vunpack.c.l.b16 %v375
      %v472 = vunpack.c.l.b16 %v376
      %v473 = vunpack.c.l.b16 %v377
      %v474 = vpack.c.b16 %v427, %v426
      %v475 = vpack.c.b16 %v429, %v428
      %v476 = vpack.c.b16 %v431, %v430
      %v477 = vpack.c.b16 %v433, %v432
      %v478 = vpack.c.b16 %v435, %v434
      %v479 = vpack.c.b16 %v437, %v436
      %v480 = vpack.c.b16 %v439, %v438
      %v481 = vpack.c.b16 %v441, %v440
      %v482 = vpack.c.b16 %v443, %v442
      %v483 = vpack.c.b16 %v445, %v444
      %v484 = vpack.c.b16 %v447, %v446
      %v485 = vpack.c.b16 %v449, %v448
      %v486 = vpack.c.b16 %v451, %v450
      %v487 = vpack.c.b16 %v453, %v452
      %v488 = vpack.c.b16 %v455, %v454
      %v489 = vpack.c.b16 %v457, %v456
      %v490 = vpack.c.b16 %v459, %v458
      %v491 = vpack.c.b16 %v461, %v460
      %v492 = vpack.c.b16 %v463, %v462
      %v493 = vpack.c.b16 %v465, %v464
      %v494 = vpack.c.b16 %v467, %v466
      %v495 = vpack.c.b16 %v469, %v468
      %v496 = vpack.c.b16 %v471, %v470
      %v497 = vpack.c.b16 %v473, %v472
      %522 = vmatpush.bf16.msra.mxu0 %v481
      %523 = vmatpush.bf16.msra.mxu0 %v480
      %524 = vmatpush.bf16.msra.mxu0 %v479
      %525 = vmatpush.bf16.msra.mxu0 %v478
      %526 = vmatpush.bf16.msra.mxu0 %v477
      %527 = vmatpush.bf16.msra.mxu0 %v476
      %528 = vmatpush.bf16.msra.mxu0 %v475
      %529 = vmatpush.bf16.msra.mxu0 %v474
      %530 = vmatmul.bf16.gmra.mxu0 %v327
      %v531 = vpop.f32.mrf.mxu0
      %v532 = vadd.f32 0.0, %v531
      %v533 = vpop.f32.mrf.mxu0
      %v534 = vadd.f32 0.0, %v533
      %535 = vdwg.mxu0
      %536 = vmatpush.bf16.msra.mxu0 %v489
      %537 = vmatpush.bf16.msra.mxu0 %v488
      %538 = vmatpush.bf16.msra.mxu0 %v487
      %539 = vmatpush.bf16.msra.mxu0 %v486
      %540 = vmatpush.bf16.msra.mxu0 %v485
      %541 = vmatpush.bf16.msra.mxu0 %v484
      %542 = vmatpush.bf16.msra.mxu0 %v483
      %543 = vmatpush.bf16.msra.mxu0 %v482
      %544 = vmatmul.bf16.gmra.mxu0 %v328
      %v545 = vpop.f32.mrf.mxu0
      %v546 = vadd.f32 %v532, %v545
      %v547 = vpop.f32.mrf.mxu0
      %v548 = vadd.f32 %v534, %v547
      %549 = vdwg.mxu0
      %550 = vmatpush.bf16.msra.mxu0 %v497
      %551 = vmatpush.bf16.msra.mxu0 %v496
      %552 = vmatpush.bf16.msra.mxu0 %v495
      %553 = vmatpush.bf16.msra.mxu0 %v494
      %554 = vmatpush.bf16.msra.mxu0 %v493
      %555 = vmatpush.bf16.msra.mxu0 %v492
      %556 = vmatpush.bf16.msra.mxu0 %v491
      %557 = vmatpush.bf16.msra.mxu0 %v490
      %558 = vmatmul.bf16.gmra.mxu0 %v329
      %v559 = vpop.f32.mrf.mxu0
      %v560 = vadd.f32 %v546, %v559
      %v561 = vpop.f32.mrf.mxu0
      %v562 = vadd.f32 %v548, %v561
      %563 = vdwg.mxu0
      %564 = vst [vmem:[%s264] sm:$0xff] %v560
      %565 = vst [vmem:[%s264 + $0x8] sm:$0xff] %v562
      %v566 = vadd.f32 %v560, %v562
      %v567 = vrot.slane %v566, 4
      %v568 = vadd.f32 %v566, %v567
      %v569 = vrot.slane %v568, 2
      %v570 = vadd.f32 %v568, %v569
      %v571 = vrot.slane %v570, 1
      %v572 = vadd.f32 %v570, %v571
      %573 = vst [vmem:[%s268] sm:$0x1] %v572
      %v574 = vmul.f32 %v560, %v560
      %v575 = vmul.f32 %v562, %v562
      %v576 = vadd.f32 %v574, %v575
      %v577 = vrot.slane %v576, 4
      %v578 = vadd.f32 %v576, %v577
      %v579 = vrot.slane %v578, 2
      %v580 = vadd.f32 %v578, %v579
      %v581 = vrot.slane %v580, 1
      %v582 = vadd.f32 %v580, %v581
      %583 = vst [vmem:[%s271] sm:$0x1] %v582
      %s584 = smul.u32 2, %s18
      %p585 = scmp.lt.s32.totalorder %s584, 3
      %s586 = scalar_select %p585, %s584, 3
      %s587 = smul.addr %s586, 8
      %s588 = scalar_lea.vmem %s4, %s587
      %p589 = scmp.lt.s32.totalorder %s18, 1
      %s590 = scalar_select %p589, %s18, 1
      %s591 = scalar_lea.vmem %s5, %s590
      %p592 = scmp.lt.s32.totalorder %s18, 1
      %s593 = scalar_select %p592, %s18, 1
      %s594 = scalar_lea.vmem %s6, %s593
      // Predicated region
      $region37: #{basic_block_forward.3} parent=35 // pred_check
        %p595 = pneg %p125
      $region38: #{basic_block_forward.3} parent=35 // pred_check_branch
        %597 = sbr.rel (%p595) target = $region40
      $region39: #{basic_block_forward.3} parent=35 // pred_region
        %s598 = smul.u32 2, %s18
      $region40: #{basic_block_forward.3} parent=35 // pred_fallthru
        _
      // Predicated region
      $region41: #{basic_block_forward.3} parent=35 // pred_check
        %p599 = pneg %p151
      $region42: #{basic_block_forward.3} parent=35 // pred_check_branch
        %601 = sbr.rel (%p599) target = $region44
      $region43: #{basic_block_forward.3} parent=35 // pred_region
        _
      $region44: #{basic_block_forward.3} parent=35 // pred_fallthru
        _
      // Predicated region
      $region45: #{basic_block_forward.3} parent=35 // pred_check
        %p602 = pneg %p177
      $region46: #{basic_block_forward.3} parent=35 // pred_check_branch
        %604 = sbr.rel (%p602) target = $region48
      $region47: #{basic_block_forward.3} parent=35 // pred_region
        _
      $region48: #{basic_block_forward.3} parent=35 // pred_fallthru
        _
    $region36: #{basic_block_forward.3} parent=5 // pred_fallthru
      _
    %p605 = scmp.le.s32.totalorder 2, %s13
    // Predicated region
    $region49: #{basic_block_forward.3} parent=5 // pred_check
      %p606 = pneg %p605
    $region50: #{basic_block_forward.3} parent=5 // pred_check_branch
      %608 = sbr.rel (%p606) target = $region52
    $region51: #{basic_block_forward.3} parent=5 // pred_region
      %s609 = ssub.s32 %s13, 2
      // Predicated region
      $region53: #{basic_block_forward.3} parent=51 // pred_check
        %p610 = pneg %p131
      $region54: #{basic_block_forward.3} parent=51 // pred_check_branch
        %612 = sbr.rel (%p610) target = $region56
      $region55: #{basic_block_forward.3} parent=51 // pred_region
        %s613 = smul.u32 2, %s19
        %p614 = scmp.lt.s32.totalorder %s613, 3
        %s615 = scalar_select %p614, %s613, 3
        %s616 = smul.addr %s615, 8
        %s617 = scalar_lea.vmem %s4, %s616
      $region56: #{basic_block_forward.3} parent=51 // pred_fallthru
        _
      // Predicated region
      $region57: #{basic_block_forward.3} parent=51 // pred_check
        %p618 = pneg %p157
      $region58: #{basic_block_forward.3} parent=51 // pred_check_branch
        %620 = sbr.rel (%p618) target = $region60
      $region59: #{basic_block_forward.3} parent=51 // pred_region
        %p621 = scmp.lt.s32.totalorder %s19, 1
        %s622 = scalar_select %p621, %s19, 1
        %s623 = scalar_lea.vmem %s5, %s622
      $region60: #{basic_block_forward.3} parent=51 // pred_fallthru
        _
      // Predicated region
      $region61: #{basic_block_forward.3} parent=51 // pred_check
        %p624 = pneg %p183
      $region62: #{basic_block_forward.3} parent=51 // pred_check_branch
        %626 = sbr.rel (%p624) target = $region64
      $region63: #{basic_block_forward.3} parent=51 // pred_region
        %p627 = scmp.lt.s32.totalorder %s19, 1
        %s628 = scalar_select %p627, %s19, 1
        %s629 = scalar_lea.vmem %s6, %s628
      $region64: #{basic_block_forward.3} parent=51 // pred_fallthru
        _
    $region52: #{basic_block_forward.3} parent=5 // pred_fallthru
      _
  $region6: #{basic_block_forward.3} parent=0 // loop_footer
    %s17 = sadd.s32 1, %s13
  $region7: #{basic_block_forward.3} parent=0 // loop_footer_branch
    %12 = sbr.rel target = $region3
  $region8: #{basic_block_forward.3} parent=0 // loop_exit
    _

// kernel: basic_block_forward.5
$region0: #{basic_block_forward.5}
  #allocation0 [shape = 'u32[]', space=smem, size = 0x4, offset = 0x4, fixed_abs, tag = 'smem constant byte address 0x4 - core index']
  #allocation1 [shape = 'u32[72,128]{1,0:T(1,128)}', space=vmem, size = 0x9000, scoped, tag = 'internal scratch']
  %s0 = inlined_call_operand.vmem [shape: f32[32,128], index: 0, kind: input, shape index: {}]
  %s1 = inlined_call_operand.vmem [shape: f32[32,128], index: 1, kind: input, shape index: {}]
  %s2 = inlined_call_operand.vmem [shape: f32[1,128], index: 2, kind: input, shape index: {}]
  %s3 = inlined_call_operand.vmem [shape: f32[1,128], index: 3, kind: input, shape index: {}]
  %s4 = inlined_call_operand.vmem [shape: f32[32,128], index: 4, kind: output, shape index: {}]
  %s5 = sld [smem:[#allocation0]]
  $region49: #{basic_block_forward.5} parent=0
    _
  %s7 = ssub.s32 1, %s5
  %s8 = scalar_select 0, %s7, %s5
  loop: start=0, step=1, limit=4
  $region2: #{basic_block_forward.5} parent=0 // loop_pre_header
    _
  $region3: #{basic_block_forward.5} parent=0 // loop_header
    %s10 = sphi 0, %s14
    %p11 = scmp.ge.s32.totalorder %s10, 4
    %s20 = sphi 0, %s22
    %s23 = sphi 0, %s20
    %s24 = sphi 0, %s23
    %s40 = sphi 0, %s24
    %s46 = sphi 0, %s48
    %s49 = sphi 0, %s46
    %s50 = sphi 0, %s49
    %s66 = sphi 0, %s50
    %s70 = sphi 0, %s70
    %s72 = sphi 0, %s70
    %s73 = sphi 0, %s72
    %s87 = sphi 0, %s73
    %s91 = sphi 0, %s91
    %s93 = sphi 0, %s91
    %s94 = sphi 0, %s93
    %s108 = sphi 0, %s94
    %s114 = sphi 0, %s116
    %s117 = sphi 0, %s114
    %s118 = sphi 0, %s117
    %s134 = sphi 0, %s118
  $region4: #{basic_block_forward.5} parent=0 // loop_header_branch
    %13 = sbr.rel (%p11) target = $region8
  $region5: #{basic_block_forward.5} parent=0 // loop_body
    %s15 = ssub.s32 %s10, 1
    %s16 = ssub.s32 %s10, 2
    %s17 = sadd.s32 %s10, 1
    %s18 = ssub.s32 %s10, %s17
    %p19 = scmp.eq.s32.totalorder %s18, 0
    %s21 = sadd.s32 %s20, 1
    %s22 = scalar_select %p19, %s20, %s21
    %p25 = pneg %p19
    %p26 = scmp.eq.s32.totalorder %s10, 1
    %p27 = por %p25, %p26
    %p28 = scmp.ne.s32.totalorder %s20, %s23
    %p29 = scmp.eq.s32.totalorder %s10, 0
    %p30 = por %p28, %p29
    %p31 = scmp.ne.s32.totalorder %s20, %s23
    %p32 = scmp.eq.s32.totalorder %s15, 1
    %p33 = por %p31, %p32
    %p34 = scmp.ne.s32.totalorder %s23, %s24
    %p35 = scmp.eq.s32.totalorder %s15, 0
    %p36 = por %p34, %p35
    %p37 = scmp.ne.s32.totalorder %s23, %s24
    %p38 = scmp.eq.s32.totalorder %s16, 1
    %p39 = por %p37, %p38
    %p41 = scmp.ne.s32.totalorder %s24, %s40
    %p42 = scmp.eq.s32.totalorder %s16, 0
    %p43 = por %p41, %p42
    %s44 = ssub.s32 %s10, %s17
    %p45 = scmp.eq.s32.totalorder %s44, 0
    %s47 = sadd.s32 %s46, 1
    %s48 = scalar_select %p45, %s46, %s47
    %p51 = pneg %p45
    %p52 = scmp.eq.s32.totalorder %s10, 1
    %p53 = por %p51, %p52
    %p54 = scmp.ne.s32.totalorder %s46, %s49
    %p55 = scmp.eq.s32.totalorder %s10, 0
    %p56 = por %p54, %p55
    %p57 = scmp.ne.s32.totalorder %s46, %s49
    %p58 = scmp.eq.s32.totalorder %s15, 1
    %p59 = por %p57, %p58
    %p60 = scmp.ne.s32.totalorder %s49, %s50
    %p61 = scmp.eq.s32.totalorder %s15, 0
    %p62 = por %p60, %p61
    %p63 = scmp.ne.s32.totalorder %s49, %s50
    %p64 = scmp.eq.s32.totalorder %s16, 1
    %p65 = por %p63, %p64
    %p67 = scmp.ne.s32.totalorder %s50, %s66
    %p68 = scmp.eq.s32.totalorder %s16, 0
    %p69 = por %p67, %p68
    %s71 = sadd.s32 %s70, 1
    %p74 = scmp.eq.s32.totalorder %s10, 1
    %p75 = scmp.ne.s32.totalorder %s70, %s72
    %p76 = scmp.eq.s32.totalorder %s10, 0
    %p77 = por %p75, %p76
    %p78 = scmp.ne.s32.totalorder %s70, %s72
    %p79 = scmp.eq.s32.totalorder %s15, 1
    %p80 = por %p78, %p79
    %p81 = scmp.ne.s32.totalorder %s72, %s73
    %p82 = scmp.eq.s32.totalorder %s15, 0
    %p83 = por %p81, %p82
    %p84 = scmp.ne.s32.totalorder %s72, %s73
    %p85 = scmp.eq.s32.totalorder %s16, 1
    %p86 = por %p84, %p85
    %p88 = scmp.ne.s32.totalorder %s73, %s87
    %p89 = scmp.eq.s32.totalorder %s16, 0
    %p90 = por %p88, %p89
    %s92 = sadd.s32 %s91, 1
    %p95 = scmp.eq.s32.totalorder %s10, 1
    %p96 = scmp.ne.s32.totalorder %s91, %s93
    %p97 = scmp.eq.s32.totalorder %s10, 0
    %p98 = por %p96, %p97
    %p99 = scmp.ne.s32.totalorder %s91, %s93
    %p100 = scmp.eq.s32.totalorder %s15, 1
    %p101 = por %p99, %p100
    %p102 = scmp.ne.s32.totalorder %s93, %s94
    %p103 = scmp.eq.s32.totalorder %s15, 0
    %p104 = por %p102, %p103
    %p105 = scmp.ne.s32.totalorder %s93, %s94
    %p106 = scmp.eq.s32.totalorder %s16, 1
    %p107 = por %p105, %p106
    %p109 = scmp.ne.s32.totalorder %s94, %s108
    %p110 = scmp.eq.s32.totalorder %s16, 0
    %p111 = por %p109, %p110
    %s112 = ssub.s32 %s10, %s17
    %p113 = scmp.eq.s32.totalorder %s112, 0
    %s115 = sadd.s32 %s114, 1
    %s116 = scalar_select %p113, %s114, %s115
    %p119 = pneg %p113
    %p120 = scmp.eq.s32.totalorder %s10, 1
    %p121 = por %p119, %p120
    %p122 = scmp.ne.s32.totalorder %s114, %s117
    %p123 = scmp.eq.s32.totalorder %s10, 0
    %p124 = por %p122, %p123
    %p125 = scmp.ne.s32.totalorder %s114, %s117
    %p126 = scmp.eq.s32.totalorder %s15, 1
    %p127 = por %p125, %p126
    %p128 = scmp.ne.s32.totalorder %s117, %s118
    %p129 = scmp.eq.s32.totalorder %s15, 0
    %p130 = por %p128, %p129
    %p131 = scmp.ne.s32.totalorder %s117, %s118
    %p132 = scmp.eq.s32.totalorder %s16, 1
    %p133 = por %p131, %p132
    %p135 = scmp.ne.s32.totalorder %s118, %s134
    %p136 = scmp.eq.s32.totalorder %s16, 0
    %p137 = por %p135, %p136
    %p138 = scmp.le.s32.totalorder 1, %s10
    %p139 = scmp.lt.s32.totalorder %s10, 3
    %p140 = pnand %p138, %p139
    %p141 = pneg %p140
    // Predicated region
    $region9: #{basic_block_forward.5} parent=5 // pred_check
      _
    $region10: #{basic_block_forward.5} parent=5 // pred_check_branch
      %143 = sbr.rel (%p140) target = $region12
    $region11: #{basic_block_forward.5} parent=5 // pred_region
      %s144 = ssub.s32 %s10, 1
      // Predicated region
      $region13: #{basic_block_forward.5} parent=11 // pred_check
        %p145 = pneg %p83
      $region14: #{basic_block_forward.5} parent=11 // pred_check_branch
        %147 = sbr.rel (%p145) target = $region16
      $region15: #{basic_block_forward.5} parent=11 // pred_region
        _
      $region16: #{basic_block_forward.5} parent=11 // pred_fallthru
        _
      // Predicated region
      $region17: #{basic_block_forward.5} parent=11 // pred_check
        %p148 = pneg %p104
      $region18: #{basic_block_forward.5} parent=11 // pred_check_branch
        %150 = sbr.rel (%p148) target = $region20
      $region19: #{basic_block_forward.5} parent=11 // pred_region
        _
      $region20: #{basic_block_forward.5} parent=11 // pred_fallthru
        _
    $region12: #{basic_block_forward.5} parent=5 // pred_fallthru
      _
    %p151 = scmp.lt.s32.totalorder %s10, 2
    // Predicated region
    $region21: #{basic_block_forward.5} parent=5 // pred_check
      %p152 = pneg %p151
    $region22: #{basic_block_forward.5} parent=5 // pred_check_branch
      %154 = sbr.rel (%p152) target = $region24
    $region23: #{basic_block_forward.5} parent=5 // pred_region
      // Predicated region
      $region25: #{basic_block_forward.5} parent=23 // pred_check
        %p155 = pneg %p30
      $region26: #{basic_block_forward.5} parent=23 // pred_check_branch
        %157 = sbr.rel (%p155) target = $region28
      $region27: #{basic_block_forward.5} parent=23 // pred_region
        %s158 = smul.u32 2, %s10
        %p159 = scmp.lt.s32.totalorder %s158, 3
        %s160 = scalar_select %p159, %s158, 3
        %s161 = smul.addr %s160, 8
        %s162 = scalar_lea.vmem %s0, %s161
        %s163 = smul.u32 2, %s10
      $region28: #{basic_block_forward.5} parent=23 // pred_fallthru
        _
      // Predicated region
      $region29: #{basic_block_forward.5} parent=23 // pred_check
        %p164 = pneg %p56
      $region30: #{basic_block_forward.5} parent=23 // pred_check_branch
        %166 = sbr.rel (%p164) target = $region32
      $region31: #{basic_block_forward.5} parent=23 // pred_region
        %s167 = smul.u32 2, %s10
        %p168 = scmp.lt.s32.totalorder %s167, 3
        %s169 = scalar_select %p168, %s167, 3
        %s170 = smul.addr %s169, 8
        %s171 = scalar_lea.vmem %s1, %s170
        %s172 = smul.u32 2, %s10
      $region32: #{basic_block_forward.5} parent=23 // pred_fallthru
        _
    $region24: #{basic_block_forward.5} parent=5 // pred_fallthru
      _
    %p173 = scmp.le.s32.totalorder 1, %s10
    %p174 = scmp.lt.s32.totalorder %s10, 3
    %p175 = pnand %p173, %p174
    %p176 = pneg %p175
    // Predicated region
    $region33: #{basic_block_forward.5} parent=5 // pred_check
      _
    $region34: #{basic_block_forward.5} parent=5 // pred_check_branch
      %178 = sbr.rel (%p175) target = $region36
    $region35: #{basic_block_forward.5} parent=5 // pred_region
      %s179 = ssub.s32 %s10, 1
      %s180 = smul.u32 2, %s15
      %p181 = scmp.lt.s32.totalorder %s180, 3
      %s182 = scalar_select %p181, %s180, 3
      %s183 = smul.addr %s182, 8
      %s184 = scalar_lea.vmem %s0, %s183
      %p185 = pneg %p36
      %p186 = pneg %p33
      %s187 = smul.u32 2, %s15
      %p188 = scmp.lt.s32.totalorder %s187, 3
      %s189 = scalar_select %p188, %s187, 3
      %s190 = smul.addr %s189, 8
      %s191 = scalar_lea.vmem %s1, %s190
      %p192 = pneg %p62
      %p193 = pneg %p59
      %p194 = pneg %p83
      %p195 = pneg %p80
      %p196 = pneg %p104
      %p197 = pneg %p101
      %p198 = pneg %p130
      %p199 = pneg %p127
      %s200 = smul.u32 2, %s15
      %p201 = scmp.lt.s32.totalorder %s200, 3
      %s202 = scalar_select %p201, %s200, 3
      %s203 = smul.addr %s202, 8
      %s204 = scalar_lea.vmem %s4, %s203
      %s205 = smul.u32 2, %s15
      %p206 = scmp.lt.s32.totalorder %s205, 3
      %s207 = scalar_select %p206, %s205, 3
      %s208 = smul.addr %s207, 8
      %s209 = scalar_lea.vmem %s0, %s208
      %s210 = smul.u32 2, %s15
      %s211 = smul.u32 2, %s15
      %p212 = scmp.lt.s32.totalorder %s211, 3
      %s213 = scalar_select %p212, %s211, 3
      %s214 = smul.addr %s213, 8
      %s215 = scalar_lea.vmem %s1, %s214
      %s216 = smul.u32 2, %s15
      %s217 = smul.u32 2, %s15
      %p218 = scmp.lt.s32.totalorder %s217, 3
      %s219 = scalar_select %p218, %s217, 3
      %s220 = smul.addr %s219, 8
      %s221 = scalar_lea.vmem %s4, %s220
      %s222 = smul.u32 2, %s15
      %v223 = vld [vmem:[%s209] sm:$0xff]
      %v224 = vld [vmem:[%s209 + $0x8] sm:$0xff]
      %v225 = vld [vmem:[%s2] sm:$0x1]
      %v227 = vperm.slane %v225, 0
      %v229 = vmul.f32 %v223, %v227
      %v230 = vmul.f32 %v224, %v227
      %v231 = vld [vmem:[%s3] sm:$0x1]
      %v233 = vperm.slane %v231, 0
      %v235 = vadd.f32 %v229, %v233
      %v236 = vadd.f32 %v230, %v233
      %v237 = vld [vmem:[%s215] sm:$0xff]
      %v238 = vld [vmem:[%s215 + $0x8] sm:$0xff]
      %v239 = vadd.f32 %v235, %v237
      %v240 = vadd.f32 %v236, %v238
      %v241 = vmax.f32 %v239, 0.0
      %v242 = vmax.f32 %v240, 0.0
      %243 = vst [vmem:[%s221] sm:$0xff] %v241
      %244 = vst [vmem:[%s221 + $0x8] sm:$0xff] %v242
      %s245 = smul.u32 2, %s15
      %p246 = scmp.lt.s32.totalorder %s245, 3
      %s247 = scalar_select %p246, %s245, 3
      %s248 = smul.addr %s247, 8
      %s249 = scalar_lea.vmem %s4, %s248
      // Predicated region
      $region37: #{basic_block_forward.5} parent=35 // pred_check
        %p250 = pneg %p127
      $region38: #{basic_block_forward.5} parent=35 // pred_check_branch
        %252 = sbr.rel (%p250) target = $region40
      $region39: #{basic_block_forward.5} parent=35 // pred_region
        %s253 = smul.u32 2, %s15
      $region40: #{basic_block_forward.5} parent=35 // pred_fallthru
        _
    $region36: #{basic_block_forward.5} parent=5 // pred_fallthru
      _
    %p254 = scmp.le.s32.totalorder 2, %s10
    // Predicated region
    $region41: #{basic_block_forward.5} parent=5 // pred_check
      %p255 = pneg %p254
    $region42: #{basic_block_forward.5} parent=5 // pred_check_branch
      %257 = sbr.rel (%p255) target = $region44
    $region43: #{basic_block_forward.5} parent=5 // pred_region
      %s258 = ssub.s32 %s10, 2
      // Predicated region
      $region45: #{basic_block_forward.5} parent=43 // pred_check
        %p259 = pneg %p133
      $region46: #{basic_block_forward.5} parent=43 // pred_check_branch
        %261 = sbr.rel (%p259) target = $region48
      $region47: #{basic_block_forward.5} parent=43 // pred_region
        %s262 = smul.u32 2, %s16
        %p263 = scmp.lt.s32.totalorder %s262, 3
        %s264 = scalar_select %p263, %s262, 3
        %s265 = smul.addr %s264, 8
        %s266 = scalar_lea.vmem %s4, %s265
      $region48: #{basic_block_forward.5} parent=43 // pred_fallthru
        _
    $region44: #{basic_block_forward.5} parent=5 // pred_fallthru
      _
  $region6: #{basic_block_forward.5} parent=0 // loop_footer
    %s14 = sadd.s32 1, %s10
  $region7: #{basic_block_forward.5} parent=0 // loop_footer_branch
    %9 = sbr.rel target = $region3
  $region8: #{basic_block_forward.5} parent=0 // loop_exit
    _

// kernel: basic_block_forward.4
$region0: #{basic_block_forward.4}
  #allocation0 [shape = 'u32[]', space=smem, size = 0x4, offset = 0x4, fixed_abs, tag = 'smem constant byte address 0x4 - core index']
  #allocation1 [shape = 'u32[72,128]{1,0:T(1,128)}', space=vmem, size = 0x9000, scoped, tag = 'internal scratch']
  %s0 = inlined_call_operand.vmem [shape: f32[32,128], index: 0, kind: input, shape index: {}]
  %s1 = inlined_call_operand.vmem [shape: bf16[384,128], index: 1, kind: input, shape index: {}]
  %s2 = inlined_call_operand.vmem [shape: f32[1,128], index: 2, kind: input, shape index: {}]
  %s3 = inlined_call_operand.vmem [shape: f32[1,128], index: 3, kind: input, shape index: {}]
  %s4 = inlined_call_operand.vmem [shape: f32[32,128], index: 4, kind: output, shape index: {0}]
  %s5 = inlined_call_operand.vmem [shape: f32[2,1,128], index: 5, kind: output, shape index: {1}]
  %s6 = inlined_call_operand.vmem [shape: f32[2,1,128], index: 6, kind: output, shape index: {2}]
  %7 = xla_tuple %s4, %s5, %s6
  %s8 = sld [smem:[#allocation0]]
  $region65: #{basic_block_forward.4} parent=0
    _
  %s10 = ssub.s32 1, %s8
  %s11 = scalar_select 0, %s10, %s8
  loop: start=0, step=1, limit=4
  $region2: #{basic_block_forward.4} parent=0 // loop_pre_header
    _
  $region3: #{basic_block_forward.4} parent=0 // loop_header
    %s13 = sphi 0, %s17
    %p14 = scmp.ge.s32.totalorder %s13, 4
    %s23 = sphi 0, %s25
    %s26 = sphi 0, %s23
    %s27 = sphi 0, %s26
    %s43 = sphi 0, %s27
    %s47 = sphi 0, %s47
    %s49 = sphi 0, %s47
    %s50 = sphi 0, %s49
    %s64 = sphi 0, %s50
    %s68 = sphi 0, %s68
    %s70 = sphi 0, %s68
    %s71 = sphi 0, %s70
    %s85 = sphi 0, %s71
    %s89 = sphi 0, %s89
    %s91 = sphi 0, %s89
    %s92 = sphi 0, %s91
    %s106 = sphi 0, %s92
    %s112 = sphi 0, %s114
    %s115 = sphi 0, %s112
    %s116 = sphi 0, %s115
    %s132 = sphi 0, %s116
    %s138 = sphi 0, %s140
    %s141 = sphi 0, %s138
    %s142 = sphi 0, %s141
    %s158 = sphi 0, %s142
    %s164 = sphi 0, %s166
    %s167 = sphi 0, %s164
    %s168 = sphi 0, %s167
    %s184 = sphi 0, %s168
  $region4: #{basic_block_forward.4} parent=0 // loop_header_branch
    %16 = sbr.rel (%p14) target = $region8
  $region5: #{basic_block_forward.4} parent=0 // loop_body
    %s18 = ssub.s32 %s13, 1
    %s19 = ssub.s32 %s13, 2
    %s20 = sadd.s32 %s13, 1
    %s21 = ssub.s32 %s13, %s20
    %p22 = scmp.eq.s32.totalorder %s21, 0
    %s24 = sadd.s32 %s23, 1
    %s25 = scalar_select %p22, %s23, %s24
    %p28 = pneg %p22
    %p29 = scmp.eq.s32.totalorder %s13, 1
    %p30 = por %p28, %p29
    %p31 = scmp.ne.s32.totalorder %s23, %s26
    %p32 = scmp.eq.s32.totalorder %s13, 0
    %p33 = por %p31, %p32
    %p34 = scmp.ne.s32.totalorder %s23, %s26
    %p35 = scmp.eq.s32.totalorder %s18, 1
    %p36 = por %p34, %p35
    %p37 = scmp.ne.s32.totalorder %s26, %s27
    %p38 = scmp.eq.s32.totalorder %s18, 0
    %p39 = por %p37, %p38
    %p40 = scmp.ne.s32.totalorder %s26, %s27
    %p41 = scmp.eq.s32.totalorder %s19, 1
    %p42 = por %p40, %p41
    %p44 = scmp.ne.s32.totalorder %s27, %s43
    %p45 = scmp.eq.s32.totalorder %s19, 0
    %p46 = por %p44, %p45
    %s48 = sadd.s32 %s47, 1
    %p51 = scmp.eq.s32.totalorder %s13, 1
    %p52 = scmp.ne.s32.totalorder %s47, %s49
    %p53 = scmp.eq.s32.totalorder %s13, 0
    %p54 = por %p52, %p53
    %p55 = scmp.ne.s32.totalorder %s47, %s49
    %p56 = scmp.eq.s32.totalorder %s18, 1
    %p57 = por %p55, %p56
    %p58 = scmp.ne.s32.totalorder %s49, %s50
    %p59 = scmp.eq.s32.totalorder %s18, 0
    %p60 = por %p58, %p59
    %p61 = scmp.ne.s32.totalorder %s49, %s50
    %p62 = scmp.eq.s32.totalorder %s19, 1
    %p63 = por %p61, %p62
    %p65 = scmp.ne.s32.totalorder %s50, %s64
    %p66 = scmp.eq.s32.totalorder %s19, 0
    %p67 = por %p65, %p66
    %s69 = sadd.s32 %s68, 1
    %p72 = scmp.eq.s32.totalorder %s13, 1
    %p73 = scmp.ne.s32.totalorder %s68, %s70
    %p74 = scmp.eq.s32.totalorder %s13, 0
    %p75 = por %p73, %p74
    %p76 = scmp.ne.s32.totalorder %s68, %s70
    %p77 = scmp.eq.s32.totalorder %s18, 1
    %p78 = por %p76, %p77
    %p79 = scmp.ne.s32.totalorder %s70, %s71
    %p80 = scmp.eq.s32.totalorder %s18, 0
    %p81 = por %p79, %p80
    %p82 = scmp.ne.s32.totalorder %s70, %s71
    %p83 = scmp.eq.s32.totalorder %s19, 1
    %p84 = por %p82, %p83
    %p86 = scmp.ne.s32.totalorder %s71, %s85
    %p87 = scmp.eq.s32.totalorder %s19, 0
    %p88 = por %p86, %p87
    %s90 = sadd.s32 %s89, 1
    %p93 = scmp.eq.s32.totalorder %s13, 1
    %p94 = scmp.ne.s32.totalorder %s89, %s91
    %p95 = scmp.eq.s32.totalorder %s13, 0
    %p96 = por %p94, %p95
    %p97 = scmp.ne.s32.totalorder %s89, %s91
    %p98 = scmp.eq.s32.totalorder %s18, 1
    %p99 = por %p97, %p98
    %p100 = scmp.ne.s32.totalorder %s91, %s92
    %p101 = scmp.eq.s32.totalorder %s18, 0
    %p102 = por %p100, %p101
    %p103 = scmp.ne.s32.totalorder %s91, %s92
    %p104 = scmp.eq.s32.totalorder %s19, 1
    %p105 = por %p103, %p104
    %p107 = scmp.ne.s32.totalorder %s92, %s106
    %p108 = scmp.eq.s32.totalorder %s19, 0
    %p109 = por %p107, %p108
    %s110 = ssub.s32 %s13, %s20
    %p111 = scmp.eq.s32.totalorder %s110, 0
    %s113 = sadd.s32 %s112, 1
    %s114 = scalar_select %p111, %s112, %s113
    %p117 = pneg %p111
    %p118 = scmp.eq.s32.totalorder %s13, 1
    %p119 = por %p117, %p118
    %p120 = scmp.ne.s32.totalorder %s112, %s115
    %p121 = scmp.eq.s32.totalorder %s13, 0
    %p122 = por %p120, %p121
    %p123 = scmp.ne.s32.totalorder %s112, %s115
    %p124 = scmp.eq.s32.totalorder %s18, 1
    %p125 = por %p123, %p124
    %p126 = scmp.ne.s32.totalorder %s115, %s116
    %p127 = scmp.eq.s32.totalorder %s18, 0
    %p128 = por %p126, %p127
    %p129 = scmp.ne.s32.totalorder %s115, %s116
    %p130 = scmp.eq.s32.totalorder %s19, 1
    %p131 = por %p129, %p130
    %p133 = scmp.ne.s32.totalorder %s116, %s132
    %p134 = scmp.eq.s32.totalorder %s19, 0
    %p135 = por %p133, %p134
    %s136 = ssub.s32 %s13, %s20
    %p137 = scmp.eq.s32.totalorder %s136, 0
    %s139 = sadd.s32 %s138, 1
    %s140 = scalar_select %p137, %s138, %s139
    %p143 = pneg %p137
    %p144 = scmp.eq.s32.totalorder %s13, 1
    %p145 = por %p143, %p144
    %p146 = scmp.ne.s32.totalorder %s138, %s141
    %p147 = scmp.eq.s32.totalorder %s13, 0
    %p148 = por %p146, %p147
    %p149 = scmp.ne.s32.totalorder %s138, %s141
    %p150 = scmp.eq.s32.totalorder %s18, 1
    %p151 = por %p149, %p150
    %p152 = scmp.ne.s32.totalorder %s141, %s142
    %p153 = scmp.eq.s32.totalorder %s18, 0
    %p154 = por %p152, %p153
    %p155 = scmp.ne.s32.totalorder %s141, %s142
    %p156 = scmp.eq.s32.totalorder %s19, 1
    %p157 = por %p155, %p156
    %p159 = scmp.ne.s32.totalorder %s142, %s158
    %p160 = scmp.eq.s32.totalorder %s19, 0
    %p161 = por %p159, %p160
    %s162 = ssub.s32 %s13, %s20
    %p163 = scmp.eq.s32.totalorder %s162, 0
    %s165 = sadd.s32 %s164, 1
    %s166 = scalar_select %p163, %s164, %s165
    %p169 = pneg %p163
    %p170 = scmp.eq.s32.totalorder %s13, 1
    %p171 = por %p169, %p170
    %p172 = scmp.ne.s32.totalorder %s164, %s167
    %p173 = scmp.eq.s32.totalorder %s13, 0
    %p174 = por %p172, %p173
    %p175 = scmp.ne.s32.totalorder %s164, %s167
    %p176 = scmp.eq.s32.totalorder %s18, 1
    %p177 = por %p175, %p176
    %p178 = scmp.ne.s32.totalorder %s167, %s168
    %p179 = scmp.eq.s32.totalorder %s18, 0
    %p180 = por %p178, %p179
    %p181 = scmp.ne.s32.totalorder %s167, %s168
    %p182 = scmp.eq.s32.totalorder %s19, 1
    %p183 = por %p181, %p182
    %p185 = scmp.ne.s32.totalorder %s168, %s184
    %p186 = scmp.eq.s32.totalorder %s19, 0
    %p187 = por %p185, %p186
    %p188 = scmp.le.s32.totalorder 1, %s13
    %p189 = scmp.lt.s32.totalorder %s13, 3
    %p190 = pnand %p188, %p189
    %p191 = pneg %p190
    // Predicated region
    $region9: #{basic_block_forward.4} parent=5 // pred_check
      _
    $region10: #{basic_block_forward.4} parent=5 // pred_check_branch
      %193 = sbr.rel (%p190) target = $region12
    $region11: #{basic_block_forward.4} parent=5 // pred_region
      %s194 = ssub.s32 %s13, 1
      // Predicated region
      $region13: #{basic_block_forward.4} parent=11 // pred_check
        %p195 = pneg %p60
      $region14: #{basic_block_forward.4} parent=11 // pred_check_branch
        %197 = sbr.rel (%p195) target = $region16
      $region15: #{basic_block_forward.4} parent=11 // pred_region
        _
      $region16: #{basic_block_forward.4} parent=11 // pred_fallthru
        _
      // Predicated region
      $region17: #{basic_block_forward.4} parent=11 // pred_check
        %p198 = pneg %p81
      $region18: #{basic_block_forward.4} parent=11 // pred_check_branch
        %200 = sbr.rel (%p198) target = $region20
      $region19: #{basic_block_forward.4} parent=11 // pred_region
        _
      $region20: #{basic_block_forward.4} parent=11 // pred_fallthru
        _
      // Predicated region
      $region21: #{basic_block_forward.4} parent=11 // pred_check
        %p201 = pneg %p102
      $region22: #{basic_block_forward.4} parent=11 // pred_check_branch
        %203 = sbr.rel (%p201) target = $region24
      $region23: #{basic_block_forward.4} parent=11 // pred_region
        _
      $region24: #{basic_block_forward.4} parent=11 // pred_fallthru
        _
    $region12: #{basic_block_forward.4} parent=5 // pred_fallthru
      _
    %p204 = scmp.lt.s32.totalorder %s13, 2
    // Predicated region
    $region25: #{basic_block_forward.4} parent=5 // pred_check
      %p205 = pneg %p204
    $region26: #{basic_block_forward.4} parent=5 // pred_check_branch
      %207 = sbr.rel (%p205) target = $region28
    $region27: #{basic_block_forward.4} parent=5 // pred_region
      // Predicated region
      $region29: #{basic_block_forward.4} parent=27 // pred_check
        %p208 = pneg %p33
      $region30: #{basic_block_forward.4} parent=27 // pred_check_branch
        %210 = sbr.rel (%p208) target = $region32
      $region31: #{basic_block_forward.4} parent=27 // pred_region
        %s211 = smul.u32 2, %s13
        %p212 = scmp.lt.s32.totalorder %s211, 3
        %s213 = scalar_select %p212, %s211, 3
        %s214 = smul.addr %s213, 8
        %s215 = scalar_lea.vmem %s0, %s214
        %s216 = smul.u32 2, %s13
      $region32: #{basic_block_forward.4} parent=27 // pred_fallthru
        _
    $region28: #{basic_block_forward.4} parent=5 // pred_fallthru
      _
    %p217 = scmp.le.s32.totalorder 1, %s13
    %p218 = scmp.lt.s32.totalorder %s13, 3
    %p219 = pnand %p217, %p218
    %p220 = pneg %p219
    // Predicated region
    $region33: #{basic_block_forward.4} parent=5 // pred_check
      _
    $region34: #{basic_block_forward.4} parent=5 // pred_check_branch
      %222 = sbr.rel (%p219) target = $region36
    $region35: #{basic_block_forward.4} parent=5 // pred_region
      %s223 = ssub.s32 %s13, 1
      %s224 = smul.u32 2, %s18
      %p225 = scmp.lt.s32.totalorder %s224, 3
      %s226 = scalar_select %p225, %s224, 3
      %s227 = smul.addr %s226, 8
      %s228 = scalar_lea.vmem %s0, %s227
      %p229 = pneg %p39
      %p230 = pneg %p36
      %p231 = pneg %p60
      %p232 = pneg %p57
      %p233 = pneg %p81
      %p234 = pneg %p78
      %p235 = pneg %p102
      %p236 = pneg %p99
      %p237 = pneg %p128
      %p238 = pneg %p125
      %s239 = smul.u32 2, %s18
      %p240 = scmp.lt.s32.totalorder %s239, 3
      %s241 = scalar_select %p240, %s239, 3
      %s242 = smul.addr %s241, 8
      %s243 = scalar_lea.vmem %s4, %s242
      %p244 = pneg %p154
      %p245 = pneg %p151
      %p246 = scmp.lt.s32.totalorder %s18, 1
      %s247 = scalar_select %p246, %s18, 1
      %s248 = scalar_lea.vmem %s5, %s247
      %p249 = pneg %p180
      %p250 = pneg %p177
      %p251 = scmp.lt.s32.totalorder %s18, 1
      %s252 = scalar_select %p251, %s18, 1
      %s253 = scalar_lea.vmem %s6, %s252
      %s254 = smul.u32 2, %s18
      %p255 = scmp.lt.s32.totalorder %s254, 3
      %s256 = scalar_select %p255, %s254, 3
      %s257 = smul.addr %s256, 8
      %s258 = scalar_lea.vmem %s0, %s257
      %s259 = smul.u32 2, %s18
      %s260 = smul.u32 2, %s18
      %p261 = scmp.lt.s32.totalorder %s260, 3
      %s262 = scalar_select %p261, %s260, 3
      %s263 = smul.addr %s262, 8
      %s264 = scalar_lea.vmem %s4, %s263
      %s265 = smul.u32 2, %s18
      %p266 = scmp.lt.s32.totalorder %s18, 1
      %s267 = scalar_select %p266, %s18, 1
      %s268 = scalar_lea.vmem %s5, %s267
      %p269 = scmp.lt.s32.totalorder %s18, 1
      %s270 = scalar_select %p269, %s18, 1
      %s271 = scalar_lea.vmem %s6, %s270
      %v272 = vld [vmem:[%s258] sm:$0xff]
      %v273 = vld [vmem:[%s258 + $0x8] sm:$0xff]
      %v274 = vld [vmem:[%s2] sm:$0x1]
      %v276 = vperm.slane %v274, 0
      %v278 = vmul.f32 %v272, %v276
      %v279 = vmul.f32 %v273, %v276
      %v280 = vld [vmem:[%s3] sm:$0x1]
      %v282 = vperm.slane %v280, 0
      %v284 = vadd.f32 %v278, %v282
      %v285 = vadd.f32 %v279, %v282
      %v286 = vmax.f32 %v284, 0.0
      %v287 = vmax.f32 %v285, 0.0
      %v288 = vlaneseq
      %v289 = vshrl.u32 %v288, 7
      %v290 = vadd.s32 %v289, 8
      %vm291 = vcmp.lt.s32.totalorder %v289, 0
      %v292 = vsub.s32 0, %v289
      %v293 = vsel %vm291, %v292, %v289
      %v294 = vshrl.u32 %v293, 4
      %v295 = vand.u32 %v293, 15
      %v296 = vsub.s32 0, %v295
      %v297 = vsel %vm291, %v296, %v295
      %vm298 = vcmp.lt.s32.totalorder %v290, 0
      %v299 = vsub.s32 0, %v290
      %v300 = vsel %vm298, %v299, %v290
      %v301 = vshrl.u32 %v300, 4
      %v302 = vand.u32 %v300, 15
      %v303 = vsub.s32 0, %v302
      %v304 = vsel %vm298, %v303, %v302
      %vm305 = vcmp.ne.s32.totalorder %v297, 0
      %vm306 = vcmp.ne.s32.totalorder %v304, 0
      %vm307 = vcmp.lt.s32.totalorder %v297, 0
      %vm308 = vcmp.lt.s32.totalorder %v304, 0
      %vm309 = vmand %vm307, %vm305
      %vm310 = vmand %vm308, %vm306
      %v311 = vadd.s32 %v297, 16
      %v312 = vadd.s32 %v304, 16
      %v313 = vsel %vm309, %v311, %v297
      %v314 = vsel %vm310, %v312, %v304
      %vm315 = vcmp.eq.s32.totalorder %v313, 0
      %vm316 = vcmp.eq.s32.totalorder %v314, 0
      %v317 = vrot.slane %v286, 7
      %v318 = vrot.slane %v287, 7
      %vm319 = vcmp.lt.s32.totalorder %v289, 1
      %v320 = vsel %vm319, %v317, %v318
      %v321 = vsel %vm319, %v318, %v317
      %v322 = vsel %vm315, 1, 0
      %v323 = vsel %vm316, 1, 0
      %vm324 = vcmp.eq.s32.totalorder %v322, 1
      %vm325 = vcmp.eq.s32.totalorder %v323, 1
      %v326 = vsel %vm324, 0.0, %v321
      %v327 = vsel %vm325, 0.0, %v320
      %vm328 = vcmp.eq.s32.totalorder %v313, 15
      %vm329 = vcmp.eq.s32.totalorder %v314, 15
      %v330 = vrot.slane %v286, 1
      %v331 = vrot.slane %v287, 1
      %vm332 = vcmp.lt.s32.totalorder %v289, 7
      %v333 = vsel %vm332, %v330, %v331
      %v334 = vsel %vm332, %v331, %v330
      %v335 = vsel %vm328, 1, 0
      %v336 = vsel %vm329, 1, 0
      %vm337 = vcmp.eq.s32.totalorder %v335, 1
      %vm338 = vcmp.eq.s32.totalorder %v336, 1
      %v339 = vsel %vm337, 0.0, %v333
      %v340 = vsel %vm338, 0.0, %v334
      %v341 = vpack.c.bf16 %v327, %v326
      %v342 = vpack.c.bf16 %v287, %v286
      %v343 = vpack.c.bf16 %v340, %v339
      %v344 = vld [vmem:[%s1] sm:$0xf]
      %v345 = vld [vmem:[%s1 + $0x4] sm:$0xf]
      %v346 = vld [vmem:[%s1 + $0x8] sm:$0xf]
      %v347 = vld [vmem:[%s1 + $0xc] sm:$0xf]
      %v348 = vld [vmem:[%s1 + $0x10] sm:$0xf]
      %v349 = vld [vmem:[%s1 + $0x14] sm:$0xf]
      %v350 = vld [vmem:[%s1 + $0x18] sm:$0xf]
      %v351 = vld [vmem:[%s1 + $0x1c] sm:$0xf]
      %v352 = vld [vmem:[%s1 + $0x20] sm:$0xf]
      %v353 = vld [vmem:[%s1 + $0x24] sm:$0xf]
      %v354 = vld [vmem:[%s1 + $0x28] sm:$0xf]
      %v355 = vld [vmem:[%s1 + $0x2c] sm:$0xf]
      %v356 = vld [vmem:[%s1 + $0x30] sm:$0xf]
      %v357 = vld [vmem:[%s1 + $0x34] sm:$0xf]
      %v358 = vld [vmem:[%s1 + $0x38] sm:$0xf]
      %v359 = vld [vmem:[%s1 + $0x3c] sm:$0xf]
      %v360 = vld [vmem:[%s1 + $0x40] sm:$0xf]
      %v361 = vld [vmem:[%s1 + $0x44] sm:$0xf]
      %v362 = vld [vmem:[%s1 + $0x48] sm:$0xf]
      %v363 = vld [vmem:[%s1 + $0x4c] sm:$0xf]
      %v364 = vld [vmem:[%s1 + $0x50] sm:$0xf]
      %v365 = vld [vmem:[%s1 + $0x54] sm:$0xf]
      %v366 = vld [vmem:[%s1 + $0x58] sm:$0xf]
      %v367 = vld [vmem:[%s1 + $0x5c] sm:$0xf]
      %v368 = vld [vmem:[%s1 + $0x60] sm:$0xf]
      %v369 = vld [vmem:[%s1 + $0x64] sm:$0xf]
      %v370 = vld [vmem:[%s1 + $0x68] sm:$0xf]
      %v371 = vld [vmem:[%s1 + $0x6c] sm:$0xf]
      %v372 = vld [vmem:[%s1 + $0x70] sm:$0xf]
      %v373 = vld [vmem:[%s1 + $0x74] sm:$0xf]
      %v374 = vld [vmem:[%s1 + $0x78] sm:$0xf]
      %v375 = vld [vmem:[%s1 + $0x7c] sm:$0xf]
      %v376 = vld [vmem:[%s1 + $0x80] sm:$0xf]
      %v377 = vld [vmem:[%s1 + $0x84] sm:$0xf]
      %v378 = vld [vmem:[%s1 + $0x88] sm:$0xf]
      %v379 = vld [vmem:[%s1 + $0x8c] sm:$0xf]
      %v380 = vld [vmem:[%s1 + $0x90] sm:$0xf]
      %v381 = vld [vmem:[%s1 + $0x94] sm:$0xf]
      %v382 = vld [vmem:[%s1 + $0x98] sm:$0xf]
      %v383 = vld [vmem:[%s1 + $0x9c] sm:$0xf]
      %v384 = vld [vmem:[%s1 + $0xa0] sm:$0xf]
      %v385 = vld [vmem:[%s1 + $0xa4] sm:$0xf]
      %v386 = vld [vmem:[%s1 + $0xa8] sm:$0xf]
      %v387 = vld [vmem:[%s1 + $0xac] sm:$0xf]
      %v388 = vld [vmem:[%s1 + $0xb0] sm:$0xf]
      %v389 = vld [vmem:[%s1 + $0xb4] sm:$0xf]
      %v390 = vld [vmem:[%s1 + $0xb8] sm:$0xf]
      %v391 = vld [vmem:[%s1 + $0xbc] sm:$0xf]
      %v440 = vunpack.c.l.b16 %v344
      %v441 = vunpack.c.l.b16 %v345
      %v442 = vunpack.c.l.b16 %v346
      %v443 = vunpack.c.l.b16 %v347
      %v444 = vunpack.c.l.b16 %v348
      %v445 = vunpack.c.l.b16 %v349
      %v446 = vunpack.c.l.b16 %v350
      %v447 = vunpack.c.l.b16 %v351
      %v448 = vunpack.c.l.b16 %v352
      %v449 = vunpack.c.l.b16 %v353
      %v450 = vunpack.c.l.b16 %v354
      %v451 = vunpack.c.l.b16 %v355
      %v452 = vunpack.c.l.b16 %v356
      %v453 = vunpack.c.l.b16 %v357
      %v454 = vunpack.c.l.b16 %v358
      %v455 = vunpack.c.l.b16 %v359
      %v456 = vunpack.c.l.b16 %v360
      %v457 = vunpack.c.l.b16 %v361
      %v458 = vunpack.c.l.b16 %v362
      %v459 = vunpack.c.l.b16 %v363
      %v460 = vunpack.c.l.b16 %v364
      %v461 = vunpack.c.l.b16 %v365
      %v462 = vunpack.c.l.b16 %v366
      %v463 = vunpack.c.l.b16 %v367
      %v464 = vunpack.c.l.b16 %v368
      %v465 = vunpack.c.l.b16 %v369
      %v466 = vunpack.c.l.b16 %v370
      %v467 = vunpack.c.l.b16 %v371
      %v468 = vunpack.c.l.b16 %v372
      %v469 = vunpack.c.l.b16 %v373
      %v470 = vunpack.c.l.b16 %v374
      %v471 = vunpack.c.l.b16 %v375
      %v472 = vunpack.c.l.b16 %v376
      %v473 = vunpack.c.l.b16 %v377
      %v474 = vunpack.c.l.b16 %v378
      %v475 = vunpack.c.l.b16 %v379
      %v476 = vunpack.c.l.b16 %v380
      %v477 = vunpack.c.l.b16 %v381
      %v478 = vunpack.c.l.b16 %v382
      %v479 = vunpack.c.l.b16 %v383
      %v480 = vunpack.c.l.b16 %v384
      %v481 = vunpack.c.l.b16 %v385
      %v482 = vunpack.c.l.b16 %v386
      %v483 = vunpack.c.l.b16 %v387
      %v484 = vunpack.c.l.b16 %v388
      %v485 = vunpack.c.l.b16 %v389
      %v486 = vunpack.c.l.b16 %v390
      %v487 = vunpack.c.l.b16 %v391
      %v488 = vpack.c.b16 %v441, %v440
      %v489 = vpack.c.b16 %v443, %v442
      %v490 = vpack.c.b16 %v445, %v444
      %v491 = vpack.c.b16 %v447, %v446
      %v492 = vpack.c.b16 %v449, %v448
      %v493 = vpack.c.b16 %v451, %v450
      %v494 = vpack.c.b16 %v453, %v452
      %v495 = vpack.c.b16 %v455, %v454
      %v496 = vpack.c.b16 %v457, %v456
      %v497 = vpack.c.b16 %v459, %v458
      %v498 = vpack.c.b16 %v461, %v460
      %v499 = vpack.c.b16 %v463, %v462
      %v500 = vpack.c.b16 %v465, %v464
      %v501 = vpack.c.b16 %v467, %v466
      %v502 = vpack.c.b16 %v469, %v468
      %v503 = vpack.c.b16 %v471, %v470
      %v504 = vpack.c.b16 %v473, %v472
      %v505 = vpack.c.b16 %v475, %v474
      %v506 = vpack.c.b16 %v477, %v476
      %v507 = vpack.c.b16 %v479, %v478
      %v508 = vpack.c.b16 %v481, %v480
      %v509 = vpack.c.b16 %v483, %v482
      %v510 = vpack.c.b16 %v485, %v484
      %v511 = vpack.c.b16 %v487, %v486
      %536 = vmatpush.bf16.msra.mxu0 %v495
      %537 = vmatpush.bf16.msra.mxu0 %v494
      %538 = vmatpush.bf16.msra.mxu0 %v493
      %539 = vmatpush.bf16.msra.mxu0 %v492
      %540 = vmatpush.bf16.msra.mxu0 %v491
      %541 = vmatpush.bf16.msra.mxu0 %v490
      %542 = vmatpush.bf16.msra.mxu0 %v489
      %543 = vmatpush.bf16.msra.mxu0 %v488
      %544 = vmatmul.bf16.gmra.mxu0 %v341
      %v545 = vpop.f32.mrf.mxu0
      %v546 = vadd.f32 0.0, %v545
      %v547 = vpop.f32.mrf.mxu0
      %v548 = vadd.f32 0.0, %v547
      %549 = vdwg.mxu0
      %550 = vmatpush.bf16.msra.mxu0 %v503
      %551 = vmatpush.bf16.msra.mxu0 %v502
      %552 = vmatpush.bf16.msra.mxu0 %v501
      %553 = vmatpush.bf16.msra.mxu0 %v500
      %554 = vmatpush.bf16.msra.mxu0 %v499
      %555 = vmatpush.bf16.msra.mxu0 %v498
      %556 = vmatpush.bf16.msra.mxu0 %v497
      %557 = vmatpush.bf16.msra.mxu0 %v496
      %558 = vmatmul.bf16.gmra.mxu0 %v342
      %v559 = vpop.f32.mrf.mxu0
      %v560 = vadd.f32 %v546, %v559
      %v561 = vpop.f32.mrf.mxu0
      %v562 = vadd.f32 %v548, %v561
      %563 = vdwg.mxu0
      %564 = vmatpush.bf16.msra.mxu0 %v511
      %565 = vmatpush.bf16.msra.mxu0 %v510
      %566 = vmatpush.bf16.msra.mxu0 %v509
      %567 = vmatpush.bf16.msra.mxu0 %v508
      %568 = vmatpush.bf16.msra.mxu0 %v507
      %569 = vmatpush.bf16.msra.mxu0 %v506
      %570 = vmatpush.bf16.msra.mxu0 %v505
      %571 = vmatpush.bf16.msra.mxu0 %v504
      %572 = vmatmul.bf16.gmra.mxu0 %v343
      %v573 = vpop.f32.mrf.mxu0
      %v574 = vadd.f32 %v560, %v573
      %v575 = vpop.f32.mrf.mxu0
      %v576 = vadd.f32 %v562, %v575
      %577 = vdwg.mxu0
      %578 = vst [vmem:[%s264] sm:$0xff] %v574
      %579 = vst [vmem:[%s264 + $0x8] sm:$0xff] %v576
      %v580 = vadd.f32 %v574, %v576
      %v581 = vrot.slane %v580, 4
      %v582 = vadd.f32 %v580, %v581
      %v583 = vrot.slane %v582, 2
      %v584 = vadd.f32 %v582, %v583
      %v585 = vrot.slane %v584, 1
      %v586 = vadd.f32 %v584, %v585
      %587 = vst [vmem:[%s268] sm:$0x1] %v586
      %v588 = vmul.f32 %v574, %v574
      %v589 = vmul.f32 %v576, %v576
      %v590 = vadd.f32 %v588, %v589
      %v591 = vrot.slane %v590, 4
      %v592 = vadd.f32 %v590, %v591
      %v593 = vrot.slane %v592, 2
      %v594 = vadd.f32 %v592, %v593
      %v595 = vrot.slane %v594, 1
      %v596 = vadd.f32 %v594, %v595
      %597 = vst [vmem:[%s271] sm:$0x1] %v596
      %s598 = smul.u32 2, %s18
      %p599 = scmp.lt.s32.totalorder %s598, 3
      %s600 = scalar_select %p599, %s598, 3
      %s601 = smul.addr %s600, 8
      %s602 = scalar_lea.vmem %s4, %s601
      %p603 = scmp.lt.s32.totalorder %s18, 1
      %s604 = scalar_select %p603, %s18, 1
      %s605 = scalar_lea.vmem %s5, %s604
      %p606 = scmp.lt.s32.totalorder %s18, 1
      %s607 = scalar_select %p606, %s18, 1
      %s608 = scalar_lea.vmem %s6, %s607
      // Predicated region
      $region37: #{basic_block_forward.4} parent=35 // pred_check
        %p609 = pneg %p125
      $region38: #{basic_block_forward.4} parent=35 // pred_check_branch
        %611 = sbr.rel (%p609) target = $region40
      $region39: #{basic_block_forward.4} parent=35 // pred_region
        %s612 = smul.u32 2, %s18
      $region40: #{basic_block_forward.4} parent=35 // pred_fallthru
        _
      // Predicated region
      $region41: #{basic_block_forward.4} parent=35 // pred_check
        %p613 = pneg %p151
      $region42: #{basic_block_forward.4} parent=35 // pred_check_branch
        %615 = sbr.rel (%p613) target = $region44
      $region43: #{basic_block_forward.4} parent=35 // pred_region
        _
      $region44: #{basic_block_forward.4} parent=35 // pred_fallthru
        _
      // Predicated region
      $region45: #{basic_block_forward.4} parent=35 // pred_check
        %p616 = pneg %p177
      $region46: #{basic_block_forward.4} parent=35 // pred_check_branch
        %618 = sbr.rel (%p616) target = $region48
      $region47: #{basic_block_forward.4} parent=35 // pred_region
        _
      $region48: #{basic_block_forward.4} parent=35 // pred_fallthru
        _
    $region36: #{basic_block_forward.4} parent=5 // pred_fallthru
      _
    %p619 = scmp.le.s32.totalorder 2, %s13
    // Predicated region
    $region49: #{basic_block_forward.4} parent=5 // pred_check
      %p620 = pneg %p619
    $region50: #{basic_block_forward.4} parent=5 // pred_check_branch
      %622 = sbr.rel (%p620) target = $region52
    $region51: #{basic_block_forward.4} parent=5 // pred_region
      %s623 = ssub.s32 %s13, 2
      // Predicated region
      $region53: #{basic_block_forward.4} parent=51 // pred_check
        %p624 = pneg %p131
      $region54: #{basic_block_forward.4} parent=51 // pred_check_branch
        %626 = sbr.rel (%p624) target = $region56
      $region55: #{basic_block_forward.4} parent=51 // pred_region
        %s627 = smul.u32 2, %s19
        %p628 = scmp.lt.s32.totalorder %s627, 3
        %s629 = scalar_select %p628, %s627, 3
        %s630 = smul.addr %s629, 8
        %s631 = scalar_lea.vmem %s4, %s630
      $region56: #{basic_block_forward.4} parent=51 // pred_fallthru
        _
      // Predicated region
      $region57: #{basic_block_forward.4} parent=51 // pred_check
        %p632 = pneg %p157
      $region58: #{basic_block_forward.4} parent=51 // pred_check_branch
        %634 = sbr.rel (%p632) target = $region60
      $region59: #{basic_block_forward.4} parent=51 // pred_region
        %p635 = scmp.lt.s32.totalorder %s19, 1
        %s636 = scalar_select %p635, %s19, 1
        %s637 = scalar_lea.vmem %s5, %s636
      $region60: #{basic_block_forward.4} parent=51 // pred_fallthru
        _
      // Predicated region
      $region61: #{basic_block_forward.4} parent=51 // pred_check
        %p638 = pneg %p183
      $region62: #{basic_block_forward.4} parent=51 // pred_check_branch
        %640 = sbr.rel (%p638) target = $region64
      $region63: #{basic_block_forward.4} parent=51 // pred_region
        %p641 = scmp.lt.s32.totalorder %s19, 1
        %s642 = scalar_select %p641, %s19, 1
        %s643 = scalar_lea.vmem %s6, %s642
      $region64: #{basic_block_forward.4} parent=51 // pred_fallthru
        _
    $region52: #{basic_block_forward.4} parent=5 // pred_fallthru
      _
  $region6: #{basic_block_forward.4} parent=0 // loop_footer
    %s17 = sadd.s32 1, %s13
  $region7: #{basic_block_forward.4} parent=0 // loop_footer_branch
    %12 = sbr.rel target = $region3
  $region8: #{basic_block_forward.4} parent=0 // loop_exit
    _

</llo_original>
